<compile_context>
chip_gen: v7x
topology: tpu7x:2x2x1
jax: 0.10.0
libtpu: 0.0.40
codegen_flags: <defaults>
</compile_context>

<pallas_src>
import functools

import jax
import jax.numpy as jnp
import numpy as np
from jax.experimental import pallas as pl
from jax.experimental.pallas import tpu as pltpu


# ----------------------------------------------------------------------------
# Fused kernel: conv1 (3 banded matmuls) -> bias+ReLU+ring-mask ->
#               conv2 (3 banded matmuls) -> bias+ReLU -> mean(H,W) via matmul.
# One grid step processes a block of `nb` images.
# ----------------------------------------------------------------------------
def cnn_extract_kernel(x_ref, m1_ref, b1_ref, mask_ref, m2_ref, b2_ref, s_ref,
                       o_ref, *, nb, h):
    hp2 = h + 2                                   # extended conv1 rows
    cw1 = m1_ref.shape[2]                         # C1 * (W+2) lanes
    fw = m2_ref.shape[2]                          # FEAT * W  lanes

    x = x_ref[...]                                # ((H+4)*nb, C_in*(W+4))

    # ---- conv1: 3 banded matmuls; dy handled by an aligned row slice ----
    acc1 = jnp.zeros((hp2 * nb, cw1), jnp.float32)
    for dy in range(3):                           # offsets are multiples of nb=8
        lhs = x[dy * nb:(dy + hp2) * nb, :]
        acc1 = acc1 + jnp.dot(lhs, m1_ref[dy],
                              preferred_element_type=jnp.float32)
    # bias + ReLU, then zero the outer ring -> this IS conv2's zero padding.
    z = jnp.maximum(acc1 + b1_ref[...], 0.0) * mask_ref[...]   # (hp2*nb, cw1)

    # ---- conv2: 3 banded matmuls (result lanes = FEAT*W = 256, dense) ----
    acc2 = jnp.zeros((h * nb, fw), jnp.float32)
    for dy in range(3):
        lhs = z[dy * nb:(dy + h) * nb, :]
        acc2 = acc2 + jnp.dot(lhs, m2_ref[dy],
                              preferred_element_type=jnp.float32)
    y = jnp.maximum(acc2 + b2_ref[...], 0.0)                    # (h*nb, FEAT*W)

    # ---- spatial mean: sum over h (free reshape: groups of nb=8 sublanes),
    #      then one (FEAT*W -> 128) projection matmul (also divides by H*W) ----
    ysum = jnp.sum(y.reshape(h, nb, fw), axis=0)                # (nb, FEAT*W)
    o_ref[...] = jnp.dot(ysum, s_ref[...],
                         preferred_element_type=jnp.float32)    # (nb, 128)


# ----------------------------------------------------------------------------
# Wrapper: takes PyTorch-layout (OIHW) conv weights and NCHW input.
# Builds the band matrices / masks once on the host side (outside the kernel).
# ----------------------------------------------------------------------------
def cnn_extract(x, w1_oihw, b1, w2_oihw, b2, block_n=8):
    x = x.astype(jnp.float32)
    w1 = w1_oihw.astype(jnp.float32)
    w2 = w2_oihw.astype(jnp.float32)
    b1 = b1.astype(jnp.float32)
    b2 = b2.astype(jnp.float32)

    N, C_in, H, W = x.shape
    C1 = w1.shape[0]
    FEAT = w2.shape[0]
    HP4, WP4 = H + 4, W + 4
    HP2, WP2 = H + 2, W + 2
    CW4 = C_in * WP4              # conv1 contracting width
    CW1 = C1 * WP2                # conv1 output / conv2 contracting width
    FW = FEAT * W                 # conv2 output width (lane-dense)
    FPAD = 128                    # pad output features to a full lane tile

    # Pad image count to a multiple of block_n (extra rows sliced off).
    n_pad = (-N) % block_n
    if n_pad:
        x = jnp.pad(x, ((0, n_pad), (0, 0), (0, 0), (0, 0)))
    Np = N + n_pad
    n_blocks = Np // block_n

    # Zero-pad spatially by 2 (covers conv1 pad=1 + conv2 pad=1 on one grid).
    xp = jnp.pad(x, ((0, 0), (0, 0), (2, 2), (2, 2)))
    # Kernel layout: rows = (block, spatial row a, image-in-block),
    #                lanes = (in-channel, column j).
    x2 = xp.reshape(n_blocks, block_n, C_in, HP4, WP4)
    x2 = jnp.transpose(x2, (0, 3, 1, 2, 4)).reshape(n_blocks * HP4 * block_n, CW4)

    # --- band matrix for conv1: M1[dy, ci*WP4+j, c1*WP2+b] = w1[c1,ci,dy,j-b] ---
    j = jnp.arange(WP4)[:, None]
    b = jnp.arange(WP2)[None, :]
    dx = j - b
    w1g = jnp.where((dx >= 0) & (dx <= 2),
                    w1[:, :, :, jnp.clip(dx, 0, 2)], 0.0)        # (C1,Cin,3,WP4,WP2)
    m1 = jnp.transpose(w1g, (2, 1, 3, 0, 4)).reshape(3, CW4, CW1)

    # --- band matrix for conv2: M2[dy, c1*WP2+b, f*W+w] = w2[f,c1,dy,b-w] ---
    bb = jnp.arange(WP2)[:, None]
    ww = jnp.arange(W)[None, :]
    dx2 = bb - ww
    w2g = jnp.where((dx2 >= 0) & (dx2 <= 2),
                    w2[:, :, :, jnp.clip(dx2, 0, 2)], 0.0)       # (F,C1,3,WP2,W)
    m2 = jnp.transpose(w2g, (2, 1, 3, 0, 4)).reshape(3, CW1, FW)

    # Biases pre-expanded to the kernel lane layouts.
    b1_lane = jnp.repeat(b1, WP2)[None, :]                       # (1, CW1)
    b2_lane = jnp.repeat(b2, W)[None, :]                         # (1, FW)

    # Interior (ring-zero) mask for the extended conv1 map, full 2-D layout.
    row_ok = ((jnp.arange(HP2) >= 1) & (jnp.arange(HP2) <= H)).astype(jnp.float32)
    col_ok = ((jnp.arange(WP2) >= 1) & (jnp.arange(WP2) <= W)).astype(jnp.float32)
    mask = (jnp.repeat(row_ok, block_n)[:, None] *
            jnp.tile(col_ok, C1)[None, :])                       # (HP2*block_n, CW1)

    # Mean-projection matrix: (FEAT*W, 128); column f sums the w-lanes of
    # feature f and divides by H*W; columns >= FEAT are zero (sliced off).
    s = jnp.repeat(jnp.eye(FEAT, dtype=jnp.float32), W, axis=0) / float(H * W)
    s = jnp.pad(s, ((0, 0), (0, FPAD - FEAT)))                   # (FW, FPAD)

    flops_per_block = 2 * (3 * (HP2 * block_n) * CW4 * CW1
                           + 3 * (H * block_n) * CW1 * FW
                           + block_n * FW * FPAD)
    bytes_per_block = 4 * (HP4 * block_n * CW4 + 3 * CW4 * CW1 + CW1
                           + HP2 * block_n * CW1 + 3 * CW1 * FW + FW
                           + FW * FPAD + block_n * FPAD)

    out = pl.pallas_call(
        functools.partial(cnn_extract_kernel, nb=block_n, h=H),
        out_shape=jax.ShapeDtypeStruct((Np, FPAD), jnp.float32),
        grid_spec=pltpu.PrefetchScalarGridSpec(
            num_scalar_prefetch=0,
            grid=(n_blocks,),
            in_specs=[
                pl.BlockSpec((HP4 * block_n, CW4), lambda n: (n, 0)),
                pl.BlockSpec((3, CW4, CW1), lambda n: (0, 0, 0)),
                pl.BlockSpec((1, CW1), lambda n: (0, 0)),
                pl.BlockSpec((HP2 * block_n, CW1), lambda n: (0, 0)),
                pl.BlockSpec((3, CW1, FW), lambda n: (0, 0, 0)),
                pl.BlockSpec((1, FW), lambda n: (0, 0)),
                pl.BlockSpec((FW, FPAD), lambda n: (0, 0)),
            ],
            out_specs=pl.BlockSpec((block_n, FPAD), lambda n: (n, 0)),
        ),
        compiler_params=pltpu.CompilerParams(
            dimension_semantics=("parallel",)),
        cost_estimate=pl.CostEstimate(
            flops=n_blocks * flops_per_block,
            transcendentals=0,
            bytes_accessed=n_blocks * bytes_per_block),
    )(x2, m1, b1_lane, mask, m2, b2_lane, s)

    return out[:N, :FEAT]


# ----------------------------------------------------------------------------
# Pure-JAX reference (matches the PyTorch CNNExtract forward).
# ----------------------------------------------------------------------------
def reference_cnn_extract(x, w1, b1, w2, b2):
    y = jax.lax.conv_general_dilated(
        x, w1, (1, 1), ((1, 1), (1, 1)),
        dimension_numbers=("NCHW", "OIHW", "NCHW"))
    y = jax.nn.relu(y + b1.reshape(1, -1, 1, 1))
    y = jax.lax.conv_general_dilated(
        y, w2, (1, 1), ((1, 1), (1, 1)),
        dimension_numbers=("NCHW", "OIHW", "NCHW"))
    y = jax.nn.relu(y + b2.reshape(1, -1, 1, 1))
    return y.mean(axis=(2, 3))


if __name__ == "__main__":
    # CNNExtract defaults: in_channels=1, out_channels=16; small 16x16 maps.
    N, C_IN, H, W = 16, 1, 16, 16
    C1, FEAT = 8, 16

    key = jax.random.PRNGKey(0)
    ks = jax.random.split(key, 5)
    w1 = 0.2 * jax.random.normal(ks[0], (C1, C_IN, 3, 3), jnp.float32)   # OIHW
    b1 = 0.1 * jax.random.normal(ks[1], (C1,), jnp.float32)
    w2 = 0.1 * jax.random.normal(ks[2], (FEAT, C1, 3, 3), jnp.float32)   # OIHW
    b2 = 0.1 * jax.random.normal(ks[3], (FEAT,), jnp.float32)
    x = jax.random.normal(ks[4], (N, C_IN, H, W), jnp.float32)

    out = jax.jit(cnn_extract)(x, w1, b1, w2, b2)
    out = jax.block_until_ready(out)
    assert out.shape == (N, FEAT)

    ref = reference_cnn_extract(x, w1, b1, w2, b2)
    np.testing.assert_allclose(np.asarray(out), np.asarray(ref),
                               rtol=1e-3, atol=1e-3)
    print("KERNEL_OK")
</pallas_src>

<mosaic_0001>
module attributes {stable_mosaic.version = 11 : i64} {
  func.func @cnn_extract_kernel(%arg0: i32, %arg1: memref<160x20xf32, #tpu.memory_space<vmem>>, %arg2: memref<3x20x144xf32, #tpu.memory_space<vmem>>, %arg3: memref<1x144xf32, #tpu.memory_space<vmem>>, %arg4: memref<144x144xf32, #tpu.memory_space<vmem>>, %arg5: memref<3x144x256xf32, #tpu.memory_space<vmem>>, %arg6: memref<1x256xf32, #tpu.memory_space<vmem>>, %arg7: memref<256x128xf32, #tpu.memory_space<vmem>>, %arg8: memref<8x128xf32, #tpu.memory_space<vmem>>) attributes {dimension_semantics = [#tpu.dimension_semantics<parallel>], iteration_bounds = array<i64: 2>, scalar_prefetch = 0 : i64, scratch_operands = 0 : i64, tpu.core_type = #tpu.core_type<tc>, window_params = [{transform_indices = @transform_0, window_bounds = array<i64: 160, 20>}, {pipeline_mode = #tpu.pipeline_mode<synchronous>, transform_indices = @transform_1, window_bounds = array<i64: 3, 20, 144>}, {pipeline_mode = #tpu.pipeline_mode<synchronous>, transform_indices = @transform_2, window_bounds = array<i64: 1, 144>}, {pipeline_mode = #tpu.pipeline_mode<synchronous>, transform_indices = @transform_3, window_bounds = array<i64: 144, 144>}, {pipeline_mode = #tpu.pipeline_mode<synchronous>, transform_indices = @transform_4, window_bounds = array<i64: 3, 144, 256>}, {pipeline_mode = #tpu.pipeline_mode<synchronous>, transform_indices = @transform_5, window_bounds = array<i64: 1, 256>}, {pipeline_mode = #tpu.pipeline_mode<synchronous>, transform_indices = @transform_6, window_bounds = array<i64: 256, 128>}, {transform_indices = @transform_7, window_bounds = array<i64: 8, 128>}]} {
    %c0 = arith.constant 0 : index
    %c0_0 = arith.constant 0 : index
    %0 = vector.load %arg1[%c0, %c0_0] : memref<160x20xf32, #tpu.memory_space<vmem>>, vector<160x20xf32>
    %cst = arith.constant 0.000000e+00 : f32
    %1 = vector.broadcast %cst : f32 to vector<144x144xf32>
    %2 = vector.extract_strided_slice %0 {offsets = [0, 0], sizes = [144, 20], strides = [1, 1]} : vector<160x20xf32> to vector<144x20xf32>
    %c0_1 = arith.constant 0 : index
    %c0_2 = arith.constant 0 : index
    %c0_3 = arith.constant 0 : index
    %3 = vector.load %arg2[%c0_1, %c0_2, %c0_3] : memref<3x20x144xf32, #tpu.memory_space<vmem>>, vector<1x20x144xf32>
    %4 = vector.shape_cast %3 : vector<1x20x144xf32> to vector<20x144xf32>
    %cst_4 = arith.constant dense<0.000000e+00> : vector<144x144xf32>
    %5 = tpu.matmul %2, %4, %cst_4 {dimension_numbers = #tpu.dot_dimension_numbers<[1], [0], [0], [1], [0, 0, 1, 1], [], []>} : vector<144x20xf32>, vector<20x144xf32>, vector<144x144xf32> -> vector<144x144xf32>
    %6 = arith.addf %1, %5 : vector<144x144xf32>
    %7 = vector.extract_strided_slice %0 {offsets = [8, 0], sizes = [144, 20], strides = [1, 1]} : vector<160x20xf32> to vector<144x20xf32>
    %c1 = arith.constant 1 : index
    %c0_5 = arith.constant 0 : index
    %c0_6 = arith.constant 0 : index
    %8 = vector.load %arg2[%c1, %c0_5, %c0_6] : memref<3x20x144xf32, #tpu.memory_space<vmem>>, vector<1x20x144xf32>
    %9 = vector.shape_cast %8 : vector<1x20x144xf32> to vector<20x144xf32>
    %cst_7 = arith.constant dense<0.000000e+00> : vector<144x144xf32>
    %10 = tpu.matmul %7, %9, %cst_7 {dimension_numbers = #tpu.dot_dimension_numbers<[1], [0], [0], [1], [0, 0, 1, 1], [], []>} : vector<144x20xf32>, vector<20x144xf32>, vector<144x144xf32> -> vector<144x144xf32>
    %11 = arith.addf %6, %10 : vector<144x144xf32>
    %12 = vector.extract_strided_slice %0 {offsets = [16, 0], sizes = [144, 20], strides = [1, 1]} : vector<160x20xf32> to vector<144x20xf32>
    %c2 = arith.constant 2 : index
    %c0_8 = arith.constant 0 : index
    %c0_9 = arith.constant 0 : index
    %13 = vector.load %arg2[%c2, %c0_8, %c0_9] : memref<3x20x144xf32, #tpu.memory_space<vmem>>, vector<1x20x144xf32>
    %14 = vector.shape_cast %13 : vector<1x20x144xf32> to vector<20x144xf32>
    %cst_10 = arith.constant dense<0.000000e+00> : vector<144x144xf32>
    %15 = tpu.matmul %12, %14, %cst_10 {dimension_numbers = #tpu.dot_dimension_numbers<[1], [0], [0], [1], [0, 0, 1, 1], [], []>} : vector<144x20xf32>, vector<20x144xf32>, vector<144x144xf32> -> vector<144x144xf32>
    %16 = arith.addf %11, %15 : vector<144x144xf32>
    %c0_11 = arith.constant 0 : index
    %c0_12 = arith.constant 0 : index
    %17 = vector.load %arg3[%c0_11, %c0_12] : memref<1x144xf32, #tpu.memory_space<vmem>>, vector<1x144xf32>
    %18 = vector.broadcast %17 : vector<1x144xf32> to vector<144x144xf32>
    %19 = arith.addf %16, %18 : vector<144x144xf32>
    %cst_13 = arith.constant 0.000000e+00 : f32
    %20 = vector.broadcast %cst_13 : f32 to vector<144x144xf32>
    %21 = arith.maximumf %19, %20 : vector<144x144xf32>
    %c0_14 = arith.constant 0 : index
    %c0_15 = arith.constant 0 : index
    %22 = vector.load %arg4[%c0_14, %c0_15] : memref<144x144xf32, #tpu.memory_space<vmem>>, vector<144x144xf32>
    %23 = arith.mulf %21, %22 : vector<144x144xf32>
    %cst_16 = arith.constant 0.000000e+00 : f32
    %24 = vector.broadcast %cst_16 : f32 to vector<128x256xf32>
    %25 = vector.extract_strided_slice %23 {offsets = [0, 0], sizes = [128, 144], strides = [1, 1]} : vector<144x144xf32> to vector<128x144xf32>
    %c0_17 = arith.constant 0 : index
    %c0_18 = arith.constant 0 : index
    %c0_19 = arith.constant 0 : index
    %26 = vector.load %arg5[%c0_17, %c0_18, %c0_19] : memref<3x144x256xf32, #tpu.memory_space<vmem>>, vector<1x144x256xf32>
    %27 = vector.shape_cast %26 : vector<1x144x256xf32> to vector<144x256xf32>
    %cst_20 = arith.constant dense<0.000000e+00> : vector<128x256xf32>
    %28 = tpu.matmul %25, %27, %cst_20 {dimension_numbers = #tpu.dot_dimension_numbers<[1], [0], [0], [1], [0, 0, 1, 1], [], []>} : vector<128x144xf32>, vector<144x256xf32>, vector<128x256xf32> -> vector<128x256xf32>
    %29 = arith.addf %24, %28 : vector<128x256xf32>
    %30 = vector.extract_strided_slice %23 {offsets = [8, 0], sizes = [128, 144], strides = [1, 1]} : vector<144x144xf32> to vector<128x144xf32>
    %c1_21 = arith.constant 1 : index
    %c0_22 = arith.constant 0 : index
    %c0_23 = arith.constant 0 : index
    %31 = vector.load %arg5[%c1_21, %c0_22, %c0_23] : memref<3x144x256xf32, #tpu.memory_space<vmem>>, vector<1x144x256xf32>
    %32 = vector.shape_cast %31 : vector<1x144x256xf32> to vector<144x256xf32>
    %cst_24 = arith.constant dense<0.000000e+00> : vector<128x256xf32>
    %33 = tpu.matmul %30, %32, %cst_24 {dimension_numbers = #tpu.dot_dimension_numbers<[1], [0], [0], [1], [0, 0, 1, 1], [], []>} : vector<128x144xf32>, vector<144x256xf32>, vector<128x256xf32> -> vector<128x256xf32>
    %34 = arith.addf %29, %33 : vector<128x256xf32>
    %35 = vector.extract_strided_slice %23 {offsets = [16, 0], sizes = [128, 144], strides = [1, 1]} : vector<144x144xf32> to vector<128x144xf32>
    %c2_25 = arith.constant 2 : index
    %c0_26 = arith.constant 0 : index
    %c0_27 = arith.constant 0 : index
    %36 = vector.load %arg5[%c2_25, %c0_26, %c0_27] : memref<3x144x256xf32, #tpu.memory_space<vmem>>, vector<1x144x256xf32>
    %37 = vector.shape_cast %36 : vector<1x144x256xf32> to vector<144x256xf32>
    %cst_28 = arith.constant dense<0.000000e+00> : vector<128x256xf32>
    %38 = tpu.matmul %35, %37, %cst_28 {dimension_numbers = #tpu.dot_dimension_numbers<[1], [0], [0], [1], [0, 0, 1, 1], [], []>} : vector<128x144xf32>, vector<144x256xf32>, vector<128x256xf32> -> vector<128x256xf32>
    %39 = arith.addf %34, %38 : vector<128x256xf32>
    %c0_29 = arith.constant 0 : index
    %c0_30 = arith.constant 0 : index
    %40 = vector.load %arg6[%c0_29, %c0_30] : memref<1x256xf32, #tpu.memory_space<vmem>>, vector<1x256xf32>
    %41 = vector.broadcast %40 : vector<1x256xf32> to vector<128x256xf32>
    %42 = arith.addf %39, %41 : vector<128x256xf32>
    %cst_31 = arith.constant 0.000000e+00 : f32
    %43 = vector.broadcast %cst_31 : f32 to vector<128x256xf32>
    %44 = arith.maximumf %42, %43 : vector<128x256xf32>
    %45 = vector.shape_cast %44 : vector<128x256xf32> to vector<16x8x256xf32>
    %cst_32 = arith.constant dense<0.000000e+00> : vector<8x256xf32>
    %46 = vector.multi_reduction <add>, %45, %cst_32 [0] : vector<16x8x256xf32> to vector<8x256xf32>
    %c0_33 = arith.constant 0 : index
    %c0_34 = arith.constant 0 : index
    %47 = vector.load %arg7[%c0_33, %c0_34] : memref<256x128xf32, #tpu.memory_space<vmem>>, vector<256x128xf32>
    %cst_35 = arith.constant dense<0.000000e+00> : vector<8x128xf32>
    %48 = tpu.matmul %46, %47, %cst_35 {dimension_numbers = #tpu.dot_dimension_numbers<[1], [0], [0], [1], [0, 0, 1, 1], [], []>} : vector<8x256xf32>, vector<256x128xf32>, vector<8x128xf32> -> vector<8x128xf32>
    %c0_36 = arith.constant 0 : index
    %c0_37 = arith.constant 0 : index
    %49 = vector.load %arg8[%c0_36, %c0_37] : memref<8x128xf32, #tpu.memory_space<vmem>>, vector<8x128xf32>
    tpu.vector_store %arg8[%c0_36, %c0_37], %48 {strides = array<i32>} : memref<8x128xf32, #tpu.memory_space<vmem>>, vector<8x128xf32>,
    return
  }
  func.func @transform_0(%arg0: i32) -> (i32, i32) {
    %c0_i32 = arith.constant 0 : i32
    %c0_i32_0 = arith.constant 0 : i32
    return %arg0, %c0_i32 : i32, i32
  }
  func.func @transform_1(%arg0: i32) -> (i32, i32, i32) {
    %c0_i32 = arith.constant 0 : i32
    %c0_i32_0 = arith.constant 0 : i32
    %c0_i32_1 = arith.constant 0 : i32
    %c0_i32_2 = arith.constant 0 : i32
    return %c0_i32, %c0_i32_0, %c0_i32_1 : i32, i32, i32
  }
  func.func @transform_2(%arg0: i32) -> (i32, i32) {
    %c0_i32 = arith.constant 0 : i32
    %c0_i32_0 = arith.constant 0 : i32
    %c0_i32_1 = arith.constant 0 : i32
    return %c0_i32, %c0_i32_0 : i32, i32
  }
  func.func @transform_3(%arg0: i32) -> (i32, i32) {
    %c0_i32 = arith.constant 0 : i32
    %c0_i32_0 = arith.constant 0 : i32
    %c0_i32_1 = arith.constant 0 : i32
    return %c0_i32, %c0_i32_0 : i32, i32
  }
  func.func @transform_4(%arg0: i32) -> (i32, i32, i32) {
    %c0_i32 = arith.constant 0 : i32
    %c0_i32_0 = arith.constant 0 : i32
    %c0_i32_1 = arith.constant 0 : i32
    %c0_i32_2 = arith.constant 0 : i32
    return %c0_i32, %c0_i32_0, %c0_i32_1 : i32, i32, i32
  }
  func.func @transform_5(%arg0: i32) -> (i32, i32) {
    %c0_i32 = arith.constant 0 : i32
    %c0_i32_0 = arith.constant 0 : i32
    %c0_i32_1 = arith.constant 0 : i32
    return %c0_i32, %c0_i32_0 : i32, i32
  }
  func.func @transform_6(%arg0: i32) -> (i32, i32) {
    %c0_i32 = arith.constant 0 : i32
    %c0_i32_0 = arith.constant 0 : i32
    %c0_i32_1 = arith.constant 0 : i32
    return %c0_i32, %c0_i32_0 : i32, i32
  }
  func.func @transform_7(%arg0: i32) -> (i32, i32) {
    %c0_i32 = arith.constant 0 : i32
    %c0_i32_0 = arith.constant 0 : i32
    return %arg0, %c0_i32 : i32, i32
  }
}

</mosaic_0001>

<llo_original>
// kernel: tile.8
$region0: #{tile.8}
  #allocation0 [shape = 's32[1]{0}', space=sflag, size = 0x4, scoped, tag = 'scoped memory for tile.8']
  %s0 = inlined_call_operand.vmem [shape: f32[18], index: 0, kind: input, shape index: {}]
  %s1 = inlined_call_operand.vmem [shape: f32[8,18], index: 1, kind: output, shape index: {}]
  // Predicated region
  $region2: #{tile.8} parent=0 // pred_check
    _
  $region3: #{tile.8} parent=0 // pred_check_branch
    %3 = sbr.rel (0) target = $region5
  $region4: #{tile.8} parent=0 // pred_region
    _
  $region5: #{tile.8} parent=0 // pred_fallthru
    _
  %v4 = vld [vmem:[%s0] ss:$0 sm:$0xff]
  %5 = vst [vmem:[%s1] sm:$0xff] %v4

// kernel: mul.8
$region0: #{mul.8}
  %s0 = inlined_call_operand.vmem [shape: f32[18,8], index: 0, kind: input, shape index: {}]
  %s1 = inlined_call_operand.vmem [shape: f32[144], index: 1, kind: output, shape index: {}]
  $region1: #{mul.8} parent=0
    #allocation0 [shape = 'u8[4096]{0}', space=vmem, size = 0x1000, scoped, tag = 'scoped mem for output reshape']
    %s2 = smov 3
    %v3 = vld [vmem:[%s0] ss:$16 sm:%s2]
    %vm4 = vcmask 64512
    %5 = vst.msk [vmem:[#allocation0] sm:$0x3] %vm4, %v3
    %s6 = scalar_lea.vmem %s0, 15
    %v7 = vld [vmem:[%s6] sm:$0x1]
    %8 = vrot.lane.b32.xlu0 %v7, 120
    %v9 = vpop.permute.xlu0 %8
    %vm10 = vcmask 1048512
    %11 = vst.msk [vmem:[#allocation0] sm:$0x1] %vm10, %v9
    %s12 = scalar_lea.vmem %s0, 14
    %v13 = vld [vmem:[%s12] sm:$0x1]
    %14 = vrot.lane.b32.xlu0 %v13, 112
    %v15 = vpop.permute.xlu0 %14
    %vm16 = vcmask 982912
    %17 = vst.msk [vmem:[#allocation0] sm:$0x1] %vm16, %v15
    %s18 = scalar_lea.vmem %s0, 13
    %v19 = vld [vmem:[%s18] sm:$0x1]
    %20 = vrot.lane.b32.xlu0 %v19, 104
    %v21 = vpop.permute.xlu0 %20
    %vm22 = vcmask 917312
    %23 = vst.msk [vmem:[#allocation0] sm:$0x1] %vm22, %v21
    %s24 = scalar_lea.vmem %s0, 12
    %v25 = vld [vmem:[%s24] sm:$0x1]
    %26 = vrot.lane.b32.xlu0 %v25, 96
    %v27 = vpop.permute.xlu0 %26
    %vm28 = vcmask 851712
    %29 = vst.msk [vmem:[#allocation0] sm:$0x1] %vm28, %v27
    %s30 = scalar_lea.vmem %s0, 11
    %v31 = vld [vmem:[%s30] sm:$0x1]
    %32 = vrot.lane.b32.xlu0 %v31, 88
    %v33 = vpop.permute.xlu0 %32
    %vm34 = vcmask 786112
    %35 = vst.msk [vmem:[#allocation0] sm:$0x1] %vm34, %v33
    %s36 = scalar_lea.vmem %s0, 10
    %v37 = vld [vmem:[%s36] sm:$0x1]
    %38 = vrot.lane.b32.xlu0 %v37, 80
    %v39 = vpop.permute.xlu0 %38
    %vm40 = vcmask 720512
    %41 = vst.msk [vmem:[#allocation0] sm:$0x1] %vm40, %v39
    %s42 = scalar_lea.vmem %s0, 9
    %v43 = vld [vmem:[%s42] sm:$0x1]
    %44 = vrot.lane.b32.xlu0 %v43, 72
    %v45 = vpop.permute.xlu0 %44
    %vm46 = vcmask 654912
    %47 = vst.msk [vmem:[#allocation0] sm:$0x1] %vm46, %v45
    %s48 = scalar_lea.vmem %s0, 8
    %v49 = vld [vmem:[%s48] sm:$0x1]
    %50 = vrot.lane.b32.xlu0 %v49, 64
    %v51 = vpop.permute.xlu0 %50
    %vm52 = vcmask 589312
    %53 = vst.msk [vmem:[#allocation0] sm:$0x1] %vm52, %v51
    %s54 = scalar_lea.vmem %s0, 7
    %v55 = vld [vmem:[%s54] sm:$0x1]
    %56 = vrot.lane.b32.xlu0 %v55, 56
    %v57 = vpop.permute.xlu0 %56
    %vm58 = vcmask 523712
    %59 = vst.msk [vmem:[#allocation0] sm:$0x1] %vm58, %v57
    %s60 = scalar_lea.vmem %s0, 6
    %v61 = vld [vmem:[%s60] sm:$0x1]
    %62 = vrot.lane.b32.xlu0 %v61, 48
    %v63 = vpop.permute.xlu0 %62
    %vm64 = vcmask 458112
    %65 = vst.msk [vmem:[#allocation0] sm:$0x1] %vm64, %v63
    %s66 = scalar_lea.vmem %s0, 5
    %v67 = vld [vmem:[%s66] sm:$0x1]
    %68 = vrot.lane.b32.xlu0 %v67, 40
    %v69 = vpop.permute.xlu0 %68
    %vm70 = vcmask 392512
    %71 = vst.msk [vmem:[#allocation0] sm:$0x1] %vm70, %v69
    %s72 = scalar_lea.vmem %s0, 4
    %v73 = vld [vmem:[%s72] sm:$0x1]
    %74 = vrot.lane.b32.xlu0 %v73, 32
    %v75 = vpop.permute.xlu0 %74
    %vm76 = vcmask 326912
    %77 = vst.msk [vmem:[#allocation0] sm:$0x1] %vm76, %v75
    %s78 = scalar_lea.vmem %s0, 3
    %v79 = vld [vmem:[%s78] sm:$0x1]
    %80 = vrot.lane.b32.xlu0 %v79, 24
    %v81 = vpop.permute.xlu0 %80
    %vm82 = vcmask 261312
    %83 = vst.msk [vmem:[#allocation0] sm:$0x1] %vm82, %v81
    %s84 = scalar_lea.vmem %s0, 2
    %v85 = vld [vmem:[%s84] sm:$0x1]
    %86 = vrot.lane.b32.xlu0 %v85, 16
    %v87 = vpop.permute.xlu0 %86
    %vm88 = vcmask 195712
    %89 = vst.msk [vmem:[#allocation0] sm:$0x1] %vm88, %v87
    %s90 = scalar_lea.vmem %s0, 1
    %s91 = smov 3
    %v92 = vld [vmem:[%s90] ss:$16 sm:%s91]
    %93 = vrot.lane.b32.xlu0 %v92, 8
    %v94 = vpop.permute.xlu0 %93
    %vm95 = vcmask 130112
    %96 = vst.msk [vmem:[#allocation0] sm:$0x3] %vm95, %v94
    %s98 = sshllo.u32 0, 2
    %v100 = vld [vmem:[#allocation0] sm:%s98]
    %s101 = sshllo.u32 0, 2
    %102 = vst [vmem:[%s1] sm:%s101] %v100

// kernel: mul.11
$region0: #{mul.11}
  %s0 = inlined_call_operand.vmem [shape: f32[8,18], index: 0, kind: input, shape index: {}]
  %s1 = inlined_call_operand.vmem [shape: f32[144], index: 1, kind: output, shape index: {}]
  $region1: #{mul.11} parent=0
    #allocation0 [shape = 'u8[4096]{0}', space=vmem, size = 0x1000, scoped, tag = 'scoped mem for output reshape']
    %v2 = vld [vmem:[%s0] sm:$0x1]
    %vm3 = vcmask 146432
    %4 = vst.msk [vmem:[#allocation0] sm:$0x1] %vm3, %v2
    %s5 = scalar_lea.vmem %s0, 7
    %v6 = vld [vmem:[%s5] sm:$0x1]
    %s7 = scalar_lea.vmem %s0, 7
    %v8 = vld [vmem:[%s7] sm:$0x1]
    %vm9 = vcmask 15360
    %v10 = vsel %vm9, %v8, %v6
    %11 = vrot.lane.b32.xlu0 %v10, 126
    %v12 = vpop.permute.xlu0 %11
    %vm13 = vcmask 130048
    %s14 = scalar_lea.vmem [#allocation0], 1
    %15 = vst.msk [vmem:[%s14] sm:$0x1] %vm13, %v12
    %vm16 = vcmask 1048560
    %17 = vst.msk [vmem:[#allocation0] sm:$0x1] %vm16, %v12
    %s18 = scalar_lea.vmem %s0, 6
    %v19 = vld [vmem:[%s18] sm:$0x1]
    %20 = vrot.lane.b32.xlu0 %v19, 108
    %v21 = vpop.permute.xlu0 %20
    %vm22 = vcmask 1032032
    %23 = vst.msk [vmem:[#allocation0] sm:$0x1] %vm22, %v21
    %s24 = scalar_lea.vmem %s0, 5
    %v25 = vld [vmem:[%s24] sm:$0x1]
    %26 = vrot.lane.b32.xlu0 %v25, 90
    %v27 = vpop.permute.xlu0 %26
    %vm28 = vcmask 884432
    %29 = vst.msk [vmem:[#allocation0] sm:$0x1] %vm28, %v27
    %s30 = scalar_lea.vmem %s0, 4
    %v31 = vld [vmem:[%s30] sm:$0x1]
    %32 = vrot.lane.b32.xlu0 %v31, 72
    %v33 = vpop.permute.xlu0 %32
    %vm34 = vcmask 736832
    %35 = vst.msk [vmem:[#allocation0] sm:$0x1] %vm34, %v33
    %s36 = scalar_lea.vmem %s0, 3
    %v37 = vld [vmem:[%s36] sm:$0x1]
    %38 = vrot.lane.b32.xlu0 %v37, 54
    %v39 = vpop.permute.xlu0 %38
    %vm40 = vcmask 589232
    %41 = vst.msk [vmem:[#allocation0] sm:$0x1] %vm40, %v39
    %s42 = scalar_lea.vmem %s0, 2
    %v43 = vld [vmem:[%s42] sm:$0x1]
    %44 = vrot.lane.b32.xlu0 %v43, 36
    %v45 = vpop.permute.xlu0 %44
    %vm46 = vcmask 441632
    %47 = vst.msk [vmem:[#allocation0] sm:$0x1] %vm46, %v45
    %s48 = scalar_lea.vmem %s0, 1
    %v49 = vld [vmem:[%s48] sm:$0x1]
    %50 = vrot.lane.b32.xlu0 %v49, 18
    %v51 = vpop.permute.xlu0 %50
    %vm52 = vcmask 294032
    %53 = vst.msk [vmem:[#allocation0] sm:$0x1] %vm52, %v51
    %s55 = sshllo.u32 0, 2
    %v57 = vld [vmem:[#allocation0] sm:%s55]
    %s58 = sshllo.u32 0, 2
    %59 = vst [vmem:[%s1] sm:%s58] %v57

// kernel: cnn_extract.1
$region0: #{cnn_extract.1}
  #allocation0 [shape = 'u32[]', space=smem, size = 0x4, offset = 0x4, fixed_abs, tag = 'smem constant byte address 0x4 - core index']
  #allocation1 [shape = 'u32[144,128]{1,0:T(1,128)}', space=vmem, size = 0x12000, scoped, tag = 'internal scratch']
  %s0 = inlined_call_operand.vmem [shape: f32[320,20], index: 0, kind: input, shape index: {}]
  %s1 = inlined_call_operand.vmem [shape: f32[3,20,144], index: 1, kind: input, shape index: {}]
  %s2 = inlined_call_operand.vmem [shape: f32[1,144], index: 2, kind: input, shape index: {}]
  %s3 = inlined_call_operand.vmem [shape: f32[144,144], index: 3, kind: input, shape index: {}]
  %s4 = inlined_call_operand.vmem [shape: f32[3,144,256], index: 4, kind: input, shape index: {}]
  %s5 = inlined_call_operand.vmem [shape: f32[1,256], index: 5, kind: input, shape index: {}]
  %s6 = inlined_call_operand.vmem [shape: f32[256,128], index: 6, kind: input, shape index: {}]
  %s7 = inlined_call_operand.hbm [shape: f32[16,128], index: 7, kind: output, shape index: {}]
  %s8 = sld [smem:[#allocation0]]
  $region61: #{cnn_extract.1} parent=0
    _
  %s10 = ssub.s32 1, %s8
  %s11 = scalar_select 0, %s10, %s8
  $region1: #{cnn_extract.1} parent=0
    #allocation2 [shape = 'u8[8192]{0}', space=vmem, size = 0x2000, scoped, tag = 'output window, operand 0']
    #allocation3 [shape = 's32[2]{0}', space=sflag, size = 0x8, scoped, tag = 'scoped memory for cnn_extract.1']
    %12 = vsyncpa [#allocation3], 0
    %s13 = scalar_lea.sflag [#allocation3], 1
    %14 = vsyncpa %s13, 0
    loop: start=0, step=1, limit=4
    $region2: #{cnn_extract.1} parent=1 // loop_pre_header
      _
    $region3: #{cnn_extract.1} parent=1 // loop_header
      %s16 = sphi 0, %s20
      %p17 = scmp.ge.s32.totalorder %s16, 4
      %s26 = sphi 0, %s28
      %s29 = sphi 0, %s26
      %s30 = sphi 0, %s29
      %s46 = sphi 0, %s30
      %s50 = sphi 0, %s50
      %s52 = sphi 0, %s50
      %s53 = sphi 0, %s52
      %s67 = sphi 0, %s53
      %s71 = sphi 0, %s71
      %s73 = sphi 0, %s71
      %s74 = sphi 0, %s73
      %s88 = sphi 0, %s74
      %s92 = sphi 0, %s92
      %s94 = sphi 0, %s92
      %s95 = sphi 0, %s94
      %s109 = sphi 0, %s95
      %s113 = sphi 0, %s113
      %s115 = sphi 0, %s113
      %s116 = sphi 0, %s115
      %s130 = sphi 0, %s116
      %s134 = sphi 0, %s134
      %s136 = sphi 0, %s134
      %s137 = sphi 0, %s136
      %s151 = sphi 0, %s137
      %s155 = sphi 0, %s155
      %s157 = sphi 0, %s155
      %s158 = sphi 0, %s157
      %s172 = sphi 0, %s158
      %s178 = sphi 0, %s180
      %s181 = sphi 0, %s178
      %s182 = sphi 0, %s181
      %s198 = sphi 0, %s182
    $region4: #{cnn_extract.1} parent=1 // loop_header_branch
      %19 = sbr.rel (%p17) target = $region8
    $region5: #{cnn_extract.1} parent=1 // loop_body
      %s21 = ssub.s32 %s16, 1
      %s22 = ssub.s32 %s16, 2
      %s23 = sadd.s32 %s16, 1
      %s24 = ssub.s32 %s16, %s23
      %p25 = scmp.eq.s32.totalorder %s24, 0
      %s27 = sadd.s32 %s26, 1
      %s28 = scalar_select %p25, %s26, %s27
      %p31 = pneg %p25
      %p32 = scmp.eq.s32.totalorder %s16, 1
      %p33 = por %p31, %p32
      %p34 = scmp.ne.s32.totalorder %s26, %s29
      %p35 = scmp.eq.s32.totalorder %s16, 0
      %p36 = por %p34, %p35
      %p37 = scmp.ne.s32.totalorder %s26, %s29
      %p38 = scmp.eq.s32.totalorder %s21, 1
      %p39 = por %p37, %p38
      %p40 = scmp.ne.s32.totalorder %s29, %s30
      %p41 = scmp.eq.s32.totalorder %s21, 0
      %p42 = por %p40, %p41
      %p43 = scmp.ne.s32.totalorder %s29, %s30
      %p44 = scmp.eq.s32.totalorder %s22, 1
      %p45 = por %p43, %p44
      %p47 = scmp.ne.s32.totalorder %s30, %s46
      %p48 = scmp.eq.s32.totalorder %s22, 0
      %p49 = por %p47, %p48
      %s51 = sadd.s32 %s50, 1
      %p54 = scmp.eq.s32.totalorder %s16, 1
      %p55 = scmp.ne.s32.totalorder %s50, %s52
      %p56 = scmp.eq.s32.totalorder %s16, 0
      %p57 = por %p55, %p56
      %p58 = scmp.ne.s32.totalorder %s50, %s52
      %p59 = scmp.eq.s32.totalorder %s21, 1
      %p60 = por %p58, %p59
      %p61 = scmp.ne.s32.totalorder %s52, %s53
      %p62 = scmp.eq.s32.totalorder %s21, 0
      %p63 = por %p61, %p62
      %p64 = scmp.ne.s32.totalorder %s52, %s53
      %p65 = scmp.eq.s32.totalorder %s22, 1
      %p66 = por %p64, %p65
      %p68 = scmp.ne.s32.totalorder %s53, %s67
      %p69 = scmp.eq.s32.totalorder %s22, 0
      %p70 = por %p68, %p69
      %s72 = sadd.s32 %s71, 1
      %p75 = scmp.eq.s32.totalorder %s16, 1
      %p76 = scmp.ne.s32.totalorder %s71, %s73
      %p77 = scmp.eq.s32.totalorder %s16, 0
      %p78 = por %p76, %p77
      %p79 = scmp.ne.s32.totalorder %s71, %s73
      %p80 = scmp.eq.s32.totalorder %s21, 1
      %p81 = por %p79, %p80
      %p82 = scmp.ne.s32.totalorder %s73, %s74
      %p83 = scmp.eq.s32.totalorder %s21, 0
      %p84 = por %p82, %p83
      %p85 = scmp.ne.s32.totalorder %s73, %s74
      %p86 = scmp.eq.s32.totalorder %s22, 1
      %p87 = por %p85, %p86
      %p89 = scmp.ne.s32.totalorder %s74, %s88
      %p90 = scmp.eq.s32.totalorder %s22, 0
      %p91 = por %p89, %p90
      %s93 = sadd.s32 %s92, 1
      %p96 = scmp.eq.s32.totalorder %s16, 1
      %p97 = scmp.ne.s32.totalorder %s92, %s94
      %p98 = scmp.eq.s32.totalorder %s16, 0
      %p99 = por %p97, %p98
      %p100 = scmp.ne.s32.totalorder %s92, %s94
      %p101 = scmp.eq.s32.totalorder %s21, 1
      %p102 = por %p100, %p101
      %p103 = scmp.ne.s32.totalorder %s94, %s95
      %p104 = scmp.eq.s32.totalorder %s21, 0
      %p105 = por %p103, %p104
      %p106 = scmp.ne.s32.totalorder %s94, %s95
      %p107 = scmp.eq.s32.totalorder %s22, 1
      %p108 = por %p106, %p107
      %p110 = scmp.ne.s32.totalorder %s95, %s109
      %p111 = scmp.eq.s32.totalorder %s22, 0
      %p112 = por %p110, %p111
      %s114 = sadd.s32 %s113, 1
      %p117 = scmp.eq.s32.totalorder %s16, 1
      %p118 = scmp.ne.s32.totalorder %s113, %s115
      %p119 = scmp.eq.s32.totalorder %s16, 0
      %p120 = por %p118, %p119
      %p121 = scmp.ne.s32.totalorder %s113, %s115
      %p122 = scmp.eq.s32.totalorder %s21, 1
      %p123 = por %p121, %p122
      %p124 = scmp.ne.s32.totalorder %s115, %s116
      %p125 = scmp.eq.s32.totalorder %s21, 0
      %p126 = por %p124, %p125
      %p127 = scmp.ne.s32.totalorder %s115, %s116
      %p128 = scmp.eq.s32.totalorder %s22, 1
      %p129 = por %p127, %p128
      %p131 = scmp.ne.s32.totalorder %s116, %s130
      %p132 = scmp.eq.s32.totalorder %s22, 0
      %p133 = por %p131, %p132
      %s135 = sadd.s32 %s134, 1
      %p138 = scmp.eq.s32.totalorder %s16, 1
      %p139 = scmp.ne.s32.totalorder %s134, %s136
      %p140 = scmp.eq.s32.totalorder %s16, 0
      %p141 = por %p139, %p140
      %p142 = scmp.ne.s32.totalorder %s134, %s136
      %p143 = scmp.eq.s32.totalorder %s21, 1
      %p144 = por %p142, %p143
      %p145 = scmp.ne.s32.totalorder %s136, %s137
      %p146 = scmp.eq.s32.totalorder %s21, 0
      %p147 = por %p145, %p146
      %p148 = scmp.ne.s32.totalorder %s136, %s137
      %p149 = scmp.eq.s32.totalorder %s22, 1
      %p150 = por %p148, %p149
      %p152 = scmp.ne.s32.totalorder %s137, %s151
      %p153 = scmp.eq.s32.totalorder %s22, 0
      %p154 = por %p152, %p153
      %s156 = sadd.s32 %s155, 1
      %p159 = scmp.eq.s32.totalorder %s16, 1
      %p160 = scmp.ne.s32.totalorder %s155, %s157
      %p161 = scmp.eq.s32.totalorder %s16, 0
      %p162 = por %p160, %p161
      %p163 = scmp.ne.s32.totalorder %s155, %s157
      %p164 = scmp.eq.s32.totalorder %s21, 1
      %p165 = por %p163, %p164
      %p166 = scmp.ne.s32.totalorder %s157, %s158
      %p167 = scmp.eq.s32.totalorder %s21, 0
      %p168 = por %p166, %p167
      %p169 = scmp.ne.s32.totalorder %s157, %s158
      %p170 = scmp.eq.s32.totalorder %s22, 1
      %p171 = por %p169, %p170
      %p173 = scmp.ne.s32.totalorder %s158, %s172
      %p174 = scmp.eq.s32.totalorder %s22, 0
      %p175 = por %p173, %p174
      %s176 = ssub.s32 %s16, %s23
      %p177 = scmp.eq.s32.totalorder %s176, 0
      %s179 = sadd.s32 %s178, 1
      %s180 = scalar_select %p177, %s178, %s179
      %p183 = pneg %p177
      %p184 = scmp.eq.s32.totalorder %s16, 1
      %p185 = por %p183, %p184
      %p186 = scmp.ne.s32.totalorder %s178, %s181
      %p187 = scmp.eq.s32.totalorder %s16, 0
      %p188 = por %p186, %p187
      %p189 = scmp.ne.s32.totalorder %s178, %s181
      %p190 = scmp.eq.s32.totalorder %s21, 1
      %p191 = por %p189, %p190
      %p192 = scmp.ne.s32.totalorder %s181, %s182
      %p193 = scmp.eq.s32.totalorder %s21, 0
      %p194 = por %p192, %p193
      %p195 = scmp.ne.s32.totalorder %s181, %s182
      %p196 = scmp.eq.s32.totalorder %s22, 1
      %p197 = por %p195, %p196
      %p199 = scmp.ne.s32.totalorder %s182, %s198
      %p200 = scmp.eq.s32.totalorder %s22, 0
      %p201 = por %p199, %p200
      %p202 = scmp.le.s32.totalorder 1, %s16
      %p203 = scmp.lt.s32.totalorder %s16, 3
      %p204 = pnand %p202, %p203
      %p205 = pneg %p204
      // Predicated region
      $region9: #{cnn_extract.1} parent=5 // pred_check
        _
      $region10: #{cnn_extract.1} parent=5 // pred_check_branch
        %207 = sbr.rel (%p204) target = $region12
      $region11: #{cnn_extract.1} parent=5 // pred_region
        %s208 = ssub.s32 %s16, 1
        // Predicated region
        $region13: #{cnn_extract.1} parent=11 // pred_check
          %p209 = pneg %p63
        $region14: #{cnn_extract.1} parent=11 // pred_check_branch
          %211 = sbr.rel (%p209) target = $region16
        $region15: #{cnn_extract.1} parent=11 // pred_region
          _
        $region16: #{cnn_extract.1} parent=11 // pred_fallthru
          _
        // Predicated region
        $region17: #{cnn_extract.1} parent=11 // pred_check
          %p212 = pneg %p84
        $region18: #{cnn_extract.1} parent=11 // pred_check_branch
          %214 = sbr.rel (%p212) target = $region20
        $region19: #{cnn_extract.1} parent=11 // pred_region
          _
        $region20: #{cnn_extract.1} parent=11 // pred_fallthru
          _
        // Predicated region
        $region21: #{cnn_extract.1} parent=11 // pred_check
          %p215 = pneg %p105
        $region22: #{cnn_extract.1} parent=11 // pred_check_branch
          %217 = sbr.rel (%p215) target = $region24
        $region23: #{cnn_extract.1} parent=11 // pred_region
          _
        $region24: #{cnn_extract.1} parent=11 // pred_fallthru
          _
        // Predicated region
        $region25: #{cnn_extract.1} parent=11 // pred_check
          %p218 = pneg %p126
        $region26: #{cnn_extract.1} parent=11 // pred_check_branch
          %220 = sbr.rel (%p218) target = $region28
        $region27: #{cnn_extract.1} parent=11 // pred_region
          _
        $region28: #{cnn_extract.1} parent=11 // pred_fallthru
          _
        // Predicated region
        $region29: #{cnn_extract.1} parent=11 // pred_check
          %p221 = pneg %p147
        $region30: #{cnn_extract.1} parent=11 // pred_check_branch
          %223 = sbr.rel (%p221) target = $region32
        $region31: #{cnn_extract.1} parent=11 // pred_region
          _
        $region32: #{cnn_extract.1} parent=11 // pred_fallthru
          _
        // Predicated region
        $region33: #{cnn_extract.1} parent=11 // pred_check
          %p224 = pneg %p168
        $region34: #{cnn_extract.1} parent=11 // pred_check_branch
          %226 = sbr.rel (%p224) target = $region36
        $region35: #{cnn_extract.1} parent=11 // pred_region
          _
        $region36: #{cnn_extract.1} parent=11 // pred_fallthru
          _
      $region12: #{cnn_extract.1} parent=5 // pred_fallthru
        _
      %p227 = scmp.lt.s32.totalorder %s16, 2
      // Predicated region
      $region37: #{cnn_extract.1} parent=5 // pred_check
        %p228 = pneg %p227
      $region38: #{cnn_extract.1} parent=5 // pred_check_branch
        %230 = sbr.rel (%p228) target = $region40
      $region39: #{cnn_extract.1} parent=5 // pred_region
        // Predicated region
        $region41: #{cnn_extract.1} parent=39 // pred_check
          %p231 = pneg %p36
        $region42: #{cnn_extract.1} parent=39 // pred_check_branch
          %233 = sbr.rel (%p231) target = $region44
        $region43: #{cnn_extract.1} parent=39 // pred_region
          %s234 = smul.u32 20, %s16
          %p235 = scmp.lt.s32.totalorder %s234, 39
          %s236 = scalar_select %p235, %s234, 39
          %s237 = smul.addr %s236, 8
          %s238 = scalar_lea.vmem %s0, %s237
          %s239 = smul.u32 20, %s16
        $region44: #{cnn_extract.1} parent=39 // pred_fallthru
          _
      $region40: #{cnn_extract.1} parent=5 // pred_fallthru
        _
      %p240 = scmp.le.s32.totalorder 1, %s16
      %p241 = scmp.lt.s32.totalorder %s16, 3
      %p242 = pnand %p240, %p241
      %p243 = pneg %p242
      // Predicated region
      $region45: #{cnn_extract.1} parent=5 // pred_check
        _
      $region46: #{cnn_extract.1} parent=5 // pred_check_branch
        %245 = sbr.rel (%p242) target = $region48
      $region47: #{cnn_extract.1} parent=5 // pred_region
        %s246 = ssub.s32 %s16, 1
        %s247 = smul.u32 20, %s21
        %p248 = scmp.lt.s32.totalorder %s247, 39
        %s249 = scalar_select %p248, %s247, 39
        %s250 = smul.addr %s249, 8
        %s251 = scalar_lea.vmem %s0, %s250
        %p252 = pneg %p42
        %p253 = pneg %p39
        %p254 = pneg %p63
        %p255 = pneg %p60
        %p256 = pneg %p84
        %p257 = pneg %p81
        %p258 = pneg %p105
        %p259 = pneg %p102
        %p260 = pneg %p126
        %p261 = pneg %p123
        %p262 = pneg %p147
        %p263 = pneg %p144
        %p264 = pneg %p168
        %p265 = pneg %p165
        %p266 = pneg %p194
        %p267 = pneg %p191
        %s268 = sand.u32 %s181, 1
        %s269 = scalar_lea.sflag [#allocation3], %s268
        %s270 = sand.u32 %s181, 1
        %s271 = smul.addr %s270, 8
        %s272 = scalar_lea.vmem [#allocation2], %s271
        %s273 = smul.u32 20, %s21
        %p274 = scmp.lt.s32.totalorder %s273, 39
        %s275 = scalar_select %p274, %s273, 39
        %s276 = smul.addr %s275, 8
        %s277 = scalar_lea.vmem %s0, %s276
        %s278 = smul.u32 20, %s21
        %v279 = vld [vmem:[%s277] sm:$0xff]
        %v280 = vld [vmem:[%s277 + $0x8] sm:$0xff]
        %v281 = vld [vmem:[%s277 + $0x10] sm:$0xff]
        %v282 = vld [vmem:[%s277 + $0x18] sm:$0xff]
        %v283 = vld [vmem:[%s277 + $0x20] sm:$0xff]
        %v284 = vld [vmem:[%s277 + $0x28] sm:$0xff]
        %v285 = vld [vmem:[%s277 + $0x30] sm:$0xff]
        %v286 = vld [vmem:[%s277 + $0x38] sm:$0xff]
        %v287 = vld [vmem:[%s277 + $0x40] sm:$0xff]
        %v288 = vld [vmem:[%s277 + $0x48] sm:$0xff]
        %v289 = vld [vmem:[%s277 + $0x50] sm:$0xff]
        %v290 = vld [vmem:[%s277 + $0x58] sm:$0xff]
        %v291 = vld [vmem:[%s277 + $0x60] sm:$0xff]
        %v292 = vld [vmem:[%s277 + $0x68] sm:$0xff]
        %v293 = vld [vmem:[%s277 + $0x70] sm:$0xff]
        %v294 = vld [vmem:[%s277 + $0x78] sm:$0xff]
        %v295 = vld [vmem:[%s277 + $0x80] sm:$0xff]
        %v296 = vld [vmem:[%s277 + $0x88] sm:$0xff]
        %v297 = vld [vmem:[%s277 + $0x90] sm:$0xff]
        %v298 = vld [vmem:[%s277 + $0x98] sm:$0xff]
        %v299 = vld [vmem:[%s1] sm:$0xff]
        %v300 = vld [vmem:[%s1 + $0x8] sm:$0xff]
        %v301 = vld [vmem:[%s1 + $0x10] sm:$0xff]
        %v302 = vld [vmem:[%s1 + $0x18] sm:$0xff]
        %v303 = vld [vmem:[%s1 + $0x20] sm:$0xf]
        %v304 = vld [vmem:[%s1 + $0x28] sm:$0xf]
        %s305 = scalar_lea.vmem %s1, 48
        %v306 = vld [vmem:[%s305] sm:$0xff]
        %v307 = vld [vmem:[%s305 + $0x8] sm:$0xff]
        %v308 = vld [vmem:[%s305 + $0x10] sm:$0xff]
        %v309 = vld [vmem:[%s305 + $0x18] sm:$0xff]
        %v310 = vld [vmem:[%s305 + $0x20] sm:$0xf]
        %v311 = vld [vmem:[%s305 + $0x28] sm:$0xf]
        %vm312 = vcmask 162816
        %v314 = vsel %vm312, %v280, 0
        %v317 = vsel %vm312, %v281, 0
        %v320 = vsel %vm312, %v282, 0
        %v323 = vsel %vm312, %v283, 0
        %v326 = vsel %vm312, %v284, 0
        %v329 = vsel %vm312, %v285, 0
        %v332 = vsel %vm312, %v286, 0
        %v335 = vsel %vm312, %v287, 0
        %v338 = vsel %vm312, %v288, 0
        %v341 = vsel %vm312, %v289, 0
        %v344 = vsel %vm312, %v290, 0
        %v347 = vsel %vm312, %v291, 0
        %v350 = vsel %vm312, %v292, 0
        %v353 = vsel %vm312, %v293, 0
        %v356 = vsel %vm312, %v294, 0
        %v359 = vsel %vm312, %v295, 0
        %v362 = vsel %vm312, %v296, 0
        %v365 = vsel %vm312, %v297, 0
        %vm367 = vcmask 1043456
        %v369 = vsel %vm367, %v310, 0
        %v372 = vsel %vm367, %v311, 0
        %374 = vmatprep.subr.mxu0 %v307
        %375 = vmatpush1.msra.mxu0 %v306
        %376 = vmatprep.subr.mxu0 %v309
        %377 = vmatpush1.msra.mxu0 %v308
        %378 = vmatprep.subr.mxu0 %v372
        %379 = vmatpush1.msra.mxu0 %v369
        %380 = vmatprep.subr.mxu0 0.0
        %381 = vmatpush1.msra.mxu0 0.0
        %382 = vmatprep.subr.mxu0 0.0
        %383 = vmatpush1.msra.mxu0 0.0
        %384 = vmatprep.subr.mxu0 0.0
        %385 = vmatpush1.msra.mxu0 0.0
        %386 = vmatprep.subr.mxu0 0.0
        %387 = vmatpush1.msra.mxu0 0.0
        %388 = vmatprep.subr.mxu0 0.0
        %389 = vmatpush1.msra.mxu0 0.0
        %390 = vmatprep.subr.mxu0 0.0
        %391 = vmatpush1.msra.mxu0 0.0
        %392 = vmatprep.subr.mxu0 0.0
        %393 = vmatpush1.msra.mxu0 0.0
        %394 = vmatprep.subr.mxu0 0.0
        %395 = vmatpush1.msra.mxu0 0.0
        %396 = vmatprep.subr.mxu0 0.0
        %397 = vmatpush1.msra.mxu0 0.0
        %398 = vmatprep.subr.mxu0 0.0
        %399 = vmatpush1.msra.mxu0 0.0
        %400 = vmatprep.subr.mxu0 0.0
        %401 = vmatpush1.msra.mxu0 0.0
        %402 = vmatprep.subr.mxu0 0.0
        %403 = vmatpush1.msra.mxu0 0.0
        %404 = vmatprep.subr.mxu0 0.0
        %405 = vmatpush1.msra.mxu0 0.0
        %406 = vmatprep.subr.mxu0 0.0
        %407 = vmatpush1.msra.mxu0 0.0
        %408 = vmatprep.subr.mxu0 0.0
        %409 = vmatpush1.msra.mxu0 0.0
        %410 = vmatprep.subr.mxu0 0.0
        %411 = vmatpush1.msra.mxu0 0.0
        %412 = vmatprep.subr.mxu0 0.0
        %413 = vmatpush1.msra.mxu0 0.0
        %414 = vmatprep.subr.mxu0 0.0
        %415 = vmatpush1.msra.mxu0 0.0
        %416 = vmatprep.subr.mxu0 0.0
        %417 = vmatpush1.msra.mxu0 0.0
        %418 = vmatprep.subr.mxu0 0.0
        %419 = vmatpush1.msra.mxu0 0.0
        %420 = vmatprep.subr.mxu0 0.0
        %421 = vmatpush1.msra.mxu0 0.0
        %422 = vmatprep.subr.mxu0 0.0
        %423 = vmatpush1.msra.mxu0 0.0
        %424 = vmatprep.subr.mxu0 0.0
        %425 = vmatpush1.msra.mxu0 0.0
        %426 = vmatprep.subr.mxu0 0.0
        %427 = vmatpush1.msra.mxu0 0.0
        %428 = vmatprep.subr.mxu0 0.0
        %429 = vmatpush1.msra.mxu0 0.0
        %430 = vmatprep.subr.mxu0 0.0
        %431 = vmatpush1.msra.mxu0 0.0
        %432 = vmatprep.subr.mxu0 0.0
        %433 = vmatpush1.msra.mxu0 0.0
        %434 = vmatprep.subr.mxu0 0.0
        %435 = vmatpush1.msra.mxu0 0.0
        %436 = vmatprep.subr.mxu0 0.0
        %437 = vmatpush1.msra.mxu0 0.0
        %438 = vmatprep.mubr.f32.mxu0 0.0
        %439 = vmatmul.mubr.f32.gmra.mrb[0].mxu0 %v314
        %v440 = vpop.f32.mrb[0].mxu0
        %v441 = vadd.f32 0.0, %v440
        %v442 = vpop.f32.mrb[0].mxu0
        %v443 = vadd.f32 0.0, %v442
        %444 = vmatprep.mubr.f32.mxu0 0.0
        %445 = vmatmul.mubr.f32.gmra.mrb[0].mxu0 %v317
        %v446 = vpop.f32.mrb[0].mxu0
        %v447 = vadd.f32 0.0, %v446
        %v448 = vpop.f32.mrb[0].mxu0
        %v449 = vadd.f32 0.0, %v448
        %450 = vmatprep.mubr.f32.mxu0 0.0
        %451 = vmatmul.mubr.f32.gmra.mrb[0].mxu0 %v320
        %v452 = vpop.f32.mrb[0].mxu0
        %v453 = vadd.f32 0.0, %v452
        %v454 = vpop.f32.mrb[0].mxu0
        %v455 = vadd.f32 0.0, %v454
        %456 = vmatprep.mubr.f32.mxu0 0.0
        %457 = vmatmul.mubr.f32.gmra.mrb[0].mxu0 %v323
        %v458 = vpop.f32.mrb[0].mxu0
        %v459 = vadd.f32 0.0, %v458
        %v460 = vpop.f32.mrb[0].mxu0
        %v461 = vadd.f32 0.0, %v460
        %462 = vmatprep.mubr.f32.mxu0 0.0
        %463 = vmatmul.mubr.f32.gmra.mrb[0].mxu0 %v326
        %v464 = vpop.f32.mrb[0].mxu0
        %v465 = vadd.f32 0.0, %v464
        %v466 = vpop.f32.mrb[0].mxu0
        %v467 = vadd.f32 0.0, %v466
        %468 = vmatprep.mubr.f32.mxu0 0.0
        %469 = vmatmul.mubr.f32.gmra.mrb[0].mxu0 %v329
        %v470 = vpop.f32.mrb[0].mxu0
        %v471 = vadd.f32 0.0, %v470
        %v472 = vpop.f32.mrb[0].mxu0
        %v473 = vadd.f32 0.0, %v472
        %474 = vmatprep.mubr.f32.mxu0 0.0
        %475 = vmatmul.mubr.f32.gmra.mrb[0].mxu0 %v332
        %v476 = vpop.f32.mrb[0].mxu0
        %v477 = vadd.f32 0.0, %v476
        %v478 = vpop.f32.mrb[0].mxu0
        %v479 = vadd.f32 0.0, %v478
        %480 = vmatprep.mubr.f32.mxu0 0.0
        %481 = vmatmul.mubr.f32.gmra.mrb[0].mxu0 %v335
        %v482 = vpop.f32.mrb[0].mxu0
        %v483 = vadd.f32 0.0, %v482
        %v484 = vpop.f32.mrb[0].mxu0
        %v485 = vadd.f32 0.0, %v484
        %486 = vmatprep.mubr.f32.mxu0 0.0
        %487 = vmatmul.mubr.f32.gmra.mrb[0].mxu0 %v338
        %v488 = vpop.f32.mrb[0].mxu0
        %v489 = vadd.f32 0.0, %v488
        %v490 = vpop.f32.mrb[0].mxu0
        %v491 = vadd.f32 0.0, %v490
        %492 = vmatprep.mubr.f32.mxu0 0.0
        %493 = vmatmul.mubr.f32.gmra.mrb[0].mxu0 %v341
        %v494 = vpop.f32.mrb[0].mxu0
        %v495 = vadd.f32 0.0, %v494
        %v496 = vpop.f32.mrb[0].mxu0
        %v497 = vadd.f32 0.0, %v496
        %498 = vmatprep.mubr.f32.mxu0 0.0
        %499 = vmatmul.mubr.f32.gmra.mrb[0].mxu0 %v344
        %v500 = vpop.f32.mrb[0].mxu0
        %v501 = vadd.f32 0.0, %v500
        %v502 = vpop.f32.mrb[0].mxu0
        %v503 = vadd.f32 0.0, %v502
        %504 = vmatprep.mubr.f32.mxu0 0.0
        %505 = vmatmul.mubr.f32.gmra.mrb[0].mxu0 %v347
        %v506 = vpop.f32.mrb[0].mxu0
        %v507 = vadd.f32 0.0, %v506
        %v508 = vpop.f32.mrb[0].mxu0
        %v509 = vadd.f32 0.0, %v508
        %510 = vmatprep.mubr.f32.mxu0 0.0
        %511 = vmatmul.mubr.f32.gmra.mrb[0].mxu0 %v350
        %v512 = vpop.f32.mrb[0].mxu0
        %v513 = vadd.f32 0.0, %v512
        %v514 = vpop.f32.mrb[0].mxu0
        %v515 = vadd.f32 0.0, %v514
        %516 = vmatprep.mubr.f32.mxu0 0.0
        %517 = vmatmul.mubr.f32.gmra.mrb[0].mxu0 %v353
        %v518 = vpop.f32.mrb[0].mxu0
        %v519 = vadd.f32 0.0, %v518
        %v520 = vpop.f32.mrb[0].mxu0
        %v521 = vadd.f32 0.0, %v520
        %522 = vmatprep.mubr.f32.mxu0 0.0
        %523 = vmatmul.mubr.f32.gmra.mrb[0].mxu0 %v356
        %v524 = vpop.f32.mrb[0].mxu0
        %v525 = vadd.f32 0.0, %v524
        %v526 = vpop.f32.mrb[0].mxu0
        %v527 = vadd.f32 0.0, %v526
        %528 = vmatprep.mubr.f32.mxu0 0.0
        %529 = vmatmul.mubr.f32.gmra.mrb[0].mxu0 %v359
        %v530 = vpop.f32.mrb[0].mxu0
        %v531 = vadd.f32 0.0, %v530
        %v532 = vpop.f32.mrb[0].mxu0
        %v533 = vadd.f32 0.0, %v532
        %534 = vmatprep.mubr.f32.mxu0 0.0
        %535 = vmatmul.mubr.f32.gmra.mrb[0].mxu0 %v362
        %v536 = vpop.f32.mrb[0].mxu0
        %v537 = vadd.f32 0.0, %v536
        %v538 = vpop.f32.mrb[0].mxu0
        %v539 = vadd.f32 0.0, %v538
        %540 = vmatprep.mubr.f32.mxu0 0.0
        %541 = vmatmul.mubr.f32.gmra.mrb[0].mxu0 %v365
        %v542 = vpop.f32.mrb[0].mxu0
        %v543 = vadd.f32 0.0, %v542
        %v544 = vpop.f32.mrb[0].mxu0
        %v545 = vadd.f32 0.0, %v544
        %546 = vdwg.mxu0
        %v548 = vsel %vm312, %v279, 0
        %v551 = vsel %vm367, %v303, 0
        %v554 = vsel %vm367, %v304, 0
        %556 = vmatprep.subr.mxu0 %v300
        %557 = vmatpush1.msra.mxu0 %v299
        %558 = vmatprep.subr.mxu0 %v302
        %559 = vmatpush1.msra.mxu0 %v301
        %560 = vmatprep.subr.mxu0 %v554
        %561 = vmatpush1.msra.mxu0 %v551
        %562 = vmatprep.subr.mxu0 0.0
        %563 = vmatpush1.msra.mxu0 0.0
        %564 = vmatprep.subr.mxu0 0.0
        %565 = vmatpush1.msra.mxu0 0.0
        %566 = vmatprep.subr.mxu0 0.0
        %567 = vmatpush1.msra.mxu0 0.0
        %568 = vmatprep.subr.mxu0 0.0
        %569 = vmatpush1.msra.mxu0 0.0
        %570 = vmatprep.subr.mxu0 0.0
        %571 = vmatpush1.msra.mxu0 0.0
        %572 = vmatprep.subr.mxu0 0.0
        %573 = vmatpush1.msra.mxu0 0.0
        %574 = vmatprep.subr.mxu0 0.0
        %575 = vmatpush1.msra.mxu0 0.0
        %576 = vmatprep.subr.mxu0 0.0
        %577 = vmatpush1.msra.mxu0 0.0
        %578 = vmatprep.subr.mxu0 0.0
        %579 = vmatpush1.msra.mxu0 0.0
        %580 = vmatprep.subr.mxu0 0.0
        %581 = vmatpush1.msra.mxu0 0.0
        %582 = vmatprep.subr.mxu0 0.0
        %583 = vmatpush1.msra.mxu0 0.0
        %584 = vmatprep.subr.mxu0 0.0
        %585 = vmatpush1.msra.mxu0 0.0
        %586 = vmatprep.subr.mxu0 0.0
        %587 = vmatpush1.msra.mxu0 0.0
        %588 = vmatprep.subr.mxu0 0.0
        %589 = vmatpush1.msra.mxu0 0.0
        %590 = vmatprep.subr.mxu0 0.0
        %591 = vmatpush1.msra.mxu0 0.0
        %592 = vmatprep.subr.mxu0 0.0
        %593 = vmatpush1.msra.mxu0 0.0
        %594 = vmatprep.subr.mxu0 0.0
        %595 = vmatpush1.msra.mxu0 0.0
        %596 = vmatprep.subr.mxu0 0.0
        %597 = vmatpush1.msra.mxu0 0.0
        %598 = vmatprep.subr.mxu0 0.0
        %599 = vmatpush1.msra.mxu0 0.0
        %600 = vmatprep.subr.mxu0 0.0
        %601 = vmatpush1.msra.mxu0 0.0
        %602 = vmatprep.subr.mxu0 0.0
        %603 = vmatpush1.msra.mxu0 0.0
        %604 = vmatprep.subr.mxu0 0.0
        %605 = vmatpush1.msra.mxu0 0.0
        %606 = vmatprep.subr.mxu0 0.0
        %607 = vmatpush1.msra.mxu0 0.0
        %608 = vmatprep.subr.mxu0 0.0
        %609 = vmatpush1.msra.mxu0 0.0
        %610 = vmatprep.subr.mxu0 0.0
        %611 = vmatpush1.msra.mxu0 0.0
        %612 = vmatprep.subr.mxu0 0.0
        %613 = vmatpush1.msra.mxu0 0.0
        %614 = vmatprep.subr.mxu0 0.0
        %615 = vmatpush1.msra.mxu0 0.0
        %616 = vmatprep.subr.mxu0 0.0
        %617 = vmatpush1.msra.mxu0 0.0
        %618 = vmatprep.subr.mxu0 0.0
        %619 = vmatpush1.msra.mxu0 0.0
        %620 = vmatprep.mubr.f32.mxu0 0.0
        %621 = vmatmul.mubr.f32.gmra.mrb[0].mxu0 %v548
        %v622 = vpop.f32.mrb[0].mxu0
        %v623 = vadd.f32 %v441, %v622
        %v624 = vpop.f32.mrb[0].mxu0
        %v625 = vadd.f32 %v443, %v624
        %626 = vmatprep.mubr.f32.mxu0 0.0
        %627 = vmatmul.mubr.f32.gmra.mrb[0].mxu0 %v314
        %v628 = vpop.f32.mrb[0].mxu0
        %v629 = vadd.f32 %v447, %v628
        %v630 = vpop.f32.mrb[0].mxu0
        %v631 = vadd.f32 %v449, %v630
        %632 = vmatprep.mubr.f32.mxu0 0.0
        %633 = vmatmul.mubr.f32.gmra.mrb[0].mxu0 %v317
        %v634 = vpop.f32.mrb[0].mxu0
        %v635 = vadd.f32 %v453, %v634
        %v636 = vpop.f32.mrb[0].mxu0
        %v637 = vadd.f32 %v455, %v636
        %638 = vmatprep.mubr.f32.mxu0 0.0
        %639 = vmatmul.mubr.f32.gmra.mrb[0].mxu0 %v320
        %v640 = vpop.f32.mrb[0].mxu0
        %v641 = vadd.f32 %v459, %v640
        %v642 = vpop.f32.mrb[0].mxu0
        %v643 = vadd.f32 %v461, %v642
        %644 = vmatprep.mubr.f32.mxu0 0.0
        %645 = vmatmul.mubr.f32.gmra.mrb[0].mxu0 %v323
        %v646 = vpop.f32.mrb[0].mxu0
        %v647 = vadd.f32 %v465, %v646
        %v648 = vpop.f32.mrb[0].mxu0
        %v649 = vadd.f32 %v467, %v648
        %650 = vmatprep.mubr.f32.mxu0 0.0
        %651 = vmatmul.mubr.f32.gmra.mrb[0].mxu0 %v326
        %v652 = vpop.f32.mrb[0].mxu0
        %v653 = vadd.f32 %v471, %v652
        %v654 = vpop.f32.mrb[0].mxu0
        %v655 = vadd.f32 %v473, %v654
        %656 = vmatprep.mubr.f32.mxu0 0.0
        %657 = vmatmul.mubr.f32.gmra.mrb[0].mxu0 %v329
        %v658 = vpop.f32.mrb[0].mxu0
        %v659 = vadd.f32 %v477, %v658
        %v660 = vpop.f32.mrb[0].mxu0
        %v661 = vadd.f32 %v479, %v660
        %662 = vmatprep.mubr.f32.mxu0 0.0
        %663 = vmatmul.mubr.f32.gmra.mrb[0].mxu0 %v332
        %v664 = vpop.f32.mrb[0].mxu0
        %v665 = vadd.f32 %v483, %v664
        %v666 = vpop.f32.mrb[0].mxu0
        %v667 = vadd.f32 %v485, %v666
        %668 = vmatprep.mubr.f32.mxu0 0.0
        %669 = vmatmul.mubr.f32.gmra.mrb[0].mxu0 %v335
        %v670 = vpop.f32.mrb[0].mxu0
        %v671 = vadd.f32 %v489, %v670
        %v672 = vpop.f32.mrb[0].mxu0
        %v673 = vadd.f32 %v491, %v672
        %674 = vmatprep.mubr.f32.mxu0 0.0
        %675 = vmatmul.mubr.f32.gmra.mrb[0].mxu0 %v338
        %v676 = vpop.f32.mrb[0].mxu0
        %v677 = vadd.f32 %v495, %v676
        %v678 = vpop.f32.mrb[0].mxu0
        %v679 = vadd.f32 %v497, %v678
        %680 = vmatprep.mubr.f32.mxu0 0.0
        %681 = vmatmul.mubr.f32.gmra.mrb[0].mxu0 %v341
        %v682 = vpop.f32.mrb[0].mxu0
        %v683 = vadd.f32 %v501, %v682
        %v684 = vpop.f32.mrb[0].mxu0
        %v685 = vadd.f32 %v503, %v684
        %686 = vmatprep.mubr.f32.mxu0 0.0
        %687 = vmatmul.mubr.f32.gmra.mrb[0].mxu0 %v344
        %v688 = vpop.f32.mrb[0].mxu0
        %v689 = vadd.f32 %v507, %v688
        %v690 = vpop.f32.mrb[0].mxu0
        %v691 = vadd.f32 %v509, %v690
        %692 = vmatprep.mubr.f32.mxu0 0.0
        %693 = vmatmul.mubr.f32.gmra.mrb[0].mxu0 %v347
        %v694 = vpop.f32.mrb[0].mxu0
        %v695 = vadd.f32 %v513, %v694
        %v696 = vpop.f32.mrb[0].mxu0
        %v697 = vadd.f32 %v515, %v696
        %698 = vmatprep.mubr.f32.mxu0 0.0
        %699 = vmatmul.mubr.f32.gmra.mrb[0].mxu0 %v350
        %v700 = vpop.f32.mrb[0].mxu0
        %v701 = vadd.f32 %v519, %v700
        %v702 = vpop.f32.mrb[0].mxu0
        %v703 = vadd.f32 %v521, %v702
        %704 = vmatprep.mubr.f32.mxu0 0.0
        %705 = vmatmul.mubr.f32.gmra.mrb[0].mxu0 %v353
        %v706 = vpop.f32.mrb[0].mxu0
        %v707 = vadd.f32 %v525, %v706
        %v708 = vpop.f32.mrb[0].mxu0
        %v709 = vadd.f32 %v527, %v708
        %710 = vmatprep.mubr.f32.mxu0 0.0
        %711 = vmatmul.mubr.f32.gmra.mrb[0].mxu0 %v356
        %v712 = vpop.f32.mrb[0].mxu0
        %v713 = vadd.f32 %v531, %v712
        %v714 = vpop.f32.mrb[0].mxu0
        %v715 = vadd.f32 %v533, %v714
        %716 = vmatprep.mubr.f32.mxu0 0.0
        %717 = vmatmul.mubr.f32.gmra.mrb[0].mxu0 %v359
        %v718 = vpop.f32.mrb[0].mxu0
        %v719 = vadd.f32 %v537, %v718
        %v720 = vpop.f32.mrb[0].mxu0
        %v721 = vadd.f32 %v539, %v720
        %722 = vmatprep.mubr.f32.mxu0 0.0
        %723 = vmatmul.mubr.f32.gmra.mrb[0].mxu0 %v362
        %v724 = vpop.f32.mrb[0].mxu0
        %v725 = vadd.f32 %v543, %v724
        %v726 = vpop.f32.mrb[0].mxu0
        %v727 = vadd.f32 %v545, %v726
        %728 = vdwg.mxu0
        %s729 = scalar_lea.vmem %s1, 96
        %v730 = vld [vmem:[%s729] sm:$0xff]
        %v731 = vld [vmem:[%s729 + $0x8] sm:$0xff]
        %v732 = vld [vmem:[%s729 + $0x10] sm:$0xff]
        %v733 = vld [vmem:[%s729 + $0x18] sm:$0xff]
        %v734 = vld [vmem:[%s729 + $0x20] sm:$0xf]
        %v735 = vld [vmem:[%s729 + $0x28] sm:$0xf]
        %v737 = vsel %vm312, %v298, 0
        %v740 = vsel %vm367, %v734, 0
        %v743 = vsel %vm367, %v735, 0
        %745 = vmatprep.subr.mxu0 %v731
        %746 = vmatpush1.msra.mxu0 %v730
        %747 = vmatprep.subr.mxu0 %v733
        %748 = vmatpush1.msra.mxu0 %v732
        %749 = vmatprep.subr.mxu0 %v743
        %750 = vmatpush1.msra.mxu0 %v740
        %751 = vmatprep.subr.mxu0 0.0
        %752 = vmatpush1.msra.mxu0 0.0
        %753 = vmatprep.subr.mxu0 0.0
        %754 = vmatpush1.msra.mxu0 0.0
        %755 = vmatprep.subr.mxu0 0.0
        %756 = vmatpush1.msra.mxu0 0.0
        %757 = vmatprep.subr.mxu0 0.0
        %758 = vmatpush1.msra.mxu0 0.0
        %759 = vmatprep.subr.mxu0 0.0
        %760 = vmatpush1.msra.mxu0 0.0
        %761 = vmatprep.subr.mxu0 0.0
        %762 = vmatpush1.msra.mxu0 0.0
        %763 = vmatprep.subr.mxu0 0.0
        %764 = vmatpush1.msra.mxu0 0.0
        %765 = vmatprep.subr.mxu0 0.0
        %766 = vmatpush1.msra.mxu0 0.0
        %767 = vmatprep.subr.mxu0 0.0
        %768 = vmatpush1.msra.mxu0 0.0
        %769 = vmatprep.subr.mxu0 0.0
        %770 = vmatpush1.msra.mxu0 0.0
        %771 = vmatprep.subr.mxu0 0.0
        %772 = vmatpush1.msra.mxu0 0.0
        %773 = vmatprep.subr.mxu0 0.0
        %774 = vmatpush1.msra.mxu0 0.0
        %775 = vmatprep.subr.mxu0 0.0
        %776 = vmatpush1.msra.mxu0 0.0
        %777 = vmatprep.subr.mxu0 0.0
        %778 = vmatpush1.msra.mxu0 0.0
        %779 = vmatprep.subr.mxu0 0.0
        %780 = vmatpush1.msra.mxu0 0.0
        %781 = vmatprep.subr.mxu0 0.0
        %782 = vmatpush1.msra.mxu0 0.0
        %783 = vmatprep.subr.mxu0 0.0
        %784 = vmatpush1.msra.mxu0 0.0
        %785 = vmatprep.subr.mxu0 0.0
        %786 = vmatpush1.msra.mxu0 0.0
        %787 = vmatprep.subr.mxu0 0.0
        %788 = vmatpush1.msra.mxu0 0.0
        %789 = vmatprep.subr.mxu0 0.0
        %790 = vmatpush1.msra.mxu0 0.0
        %791 = vmatprep.subr.mxu0 0.0
        %792 = vmatpush1.msra.mxu0 0.0
        %793 = vmatprep.subr.mxu0 0.0
        %794 = vmatpush1.msra.mxu0 0.0
        %795 = vmatprep.subr.mxu0 0.0
        %796 = vmatpush1.msra.mxu0 0.0
        %797 = vmatprep.subr.mxu0 0.0
        %798 = vmatpush1.msra.mxu0 0.0
        %799 = vmatprep.subr.mxu0 0.0
        %800 = vmatpush1.msra.mxu0 0.0
        %801 = vmatprep.subr.mxu0 0.0
        %802 = vmatpush1.msra.mxu0 0.0
        %803 = vmatprep.subr.mxu0 0.0
        %804 = vmatpush1.msra.mxu0 0.0
        %805 = vmatprep.subr.mxu0 0.0
        %806 = vmatpush1.msra.mxu0 0.0
        %807 = vmatprep.subr.mxu0 0.0
        %808 = vmatpush1.msra.mxu0 0.0
        %809 = vmatprep.mubr.f32.mxu0 0.0
        %810 = vmatmul.mubr.f32.gmra.mrb[0].mxu0 %v317
        %v811 = vpop.f32.mrb[0].mxu0
        %v812 = vadd.f32 0.0, %v811
        %v813 = vpop.f32.mrb[0].mxu0
        %v814 = vadd.f32 0.0, %v813
        %815 = vmatprep.mubr.f32.mxu0 0.0
        %816 = vmatmul.mubr.f32.gmra.mrb[0].mxu0 %v320
        %v817 = vpop.f32.mrb[0].mxu0
        %v818 = vadd.f32 0.0, %v817
        %v819 = vpop.f32.mrb[0].mxu0
        %v820 = vadd.f32 0.0, %v819
        %821 = vmatprep.mubr.f32.mxu0 0.0
        %822 = vmatmul.mubr.f32.gmra.mrb[0].mxu0 %v323
        %v823 = vpop.f32.mrb[0].mxu0
        %v824 = vadd.f32 0.0, %v823
        %v825 = vpop.f32.mrb[0].mxu0
        %v826 = vadd.f32 0.0, %v825
        %827 = vmatprep.mubr.f32.mxu0 0.0
        %828 = vmatmul.mubr.f32.gmra.mrb[0].mxu0 %v326
        %v829 = vpop.f32.mrb[0].mxu0
        %v830 = vadd.f32 0.0, %v829
        %v831 = vpop.f32.mrb[0].mxu0
        %v832 = vadd.f32 0.0, %v831
        %833 = vmatprep.mubr.f32.mxu0 0.0
        %834 = vmatmul.mubr.f32.gmra.mrb[0].mxu0 %v329
        %v835 = vpop.f32.mrb[0].mxu0
        %v836 = vadd.f32 0.0, %v835
        %v837 = vpop.f32.mrb[0].mxu0
        %v838 = vadd.f32 0.0, %v837
        %839 = vmatprep.mubr.f32.mxu0 0.0
        %840 = vmatmul.mubr.f32.gmra.mrb[0].mxu0 %v332
        %v841 = vpop.f32.mrb[0].mxu0
        %v842 = vadd.f32 0.0, %v841
        %v843 = vpop.f32.mrb[0].mxu0
        %v844 = vadd.f32 0.0, %v843
        %845 = vmatprep.mubr.f32.mxu0 0.0
        %846 = vmatmul.mubr.f32.gmra.mrb[0].mxu0 %v335
        %v847 = vpop.f32.mrb[0].mxu0
        %v848 = vadd.f32 0.0, %v847
        %v849 = vpop.f32.mrb[0].mxu0
        %v850 = vadd.f32 0.0, %v849
        %851 = vmatprep.mubr.f32.mxu0 0.0
        %852 = vmatmul.mubr.f32.gmra.mrb[0].mxu0 %v338
        %v853 = vpop.f32.mrb[0].mxu0
        %v854 = vadd.f32 0.0, %v853
        %v855 = vpop.f32.mrb[0].mxu0
        %v856 = vadd.f32 0.0, %v855
        %857 = vmatprep.mubr.f32.mxu0 0.0
        %858 = vmatmul.mubr.f32.gmra.mrb[0].mxu0 %v341
        %v859 = vpop.f32.mrb[0].mxu0
        %v860 = vadd.f32 0.0, %v859
        %v861 = vpop.f32.mrb[0].mxu0
        %v862 = vadd.f32 0.0, %v861
        %863 = vmatprep.mubr.f32.mxu0 0.0
        %864 = vmatmul.mubr.f32.gmra.mrb[0].mxu0 %v344
        %v865 = vpop.f32.mrb[0].mxu0
        %v866 = vadd.f32 0.0, %v865
        %v867 = vpop.f32.mrb[0].mxu0
        %v868 = vadd.f32 0.0, %v867
        %869 = vmatprep.mubr.f32.mxu0 0.0
        %870 = vmatmul.mubr.f32.gmra.mrb[0].mxu0 %v347
        %v871 = vpop.f32.mrb[0].mxu0
        %v872 = vadd.f32 0.0, %v871
        %v873 = vpop.f32.mrb[0].mxu0
        %v874 = vadd.f32 0.0, %v873
        %875 = vmatprep.mubr.f32.mxu0 0.0
        %876 = vmatmul.mubr.f32.gmra.mrb[0].mxu0 %v350
        %v877 = vpop.f32.mrb[0].mxu0
        %v878 = vadd.f32 0.0, %v877
        %v879 = vpop.f32.mrb[0].mxu0
        %v880 = vadd.f32 0.0, %v879
        %881 = vmatprep.mubr.f32.mxu0 0.0
        %882 = vmatmul.mubr.f32.gmra.mrb[0].mxu0 %v353
        %v883 = vpop.f32.mrb[0].mxu0
        %v884 = vadd.f32 0.0, %v883
        %v885 = vpop.f32.mrb[0].mxu0
        %v886 = vadd.f32 0.0, %v885
        %887 = vmatprep.mubr.f32.mxu0 0.0
        %888 = vmatmul.mubr.f32.gmra.mrb[0].mxu0 %v356
        %v889 = vpop.f32.mrb[0].mxu0
        %v890 = vadd.f32 0.0, %v889
        %v891 = vpop.f32.mrb[0].mxu0
        %v892 = vadd.f32 0.0, %v891
        %893 = vmatprep.mubr.f32.mxu0 0.0
        %894 = vmatmul.mubr.f32.gmra.mrb[0].mxu0 %v359
        %v895 = vpop.f32.mrb[0].mxu0
        %v896 = vadd.f32 0.0, %v895
        %v897 = vpop.f32.mrb[0].mxu0
        %v898 = vadd.f32 0.0, %v897
        %899 = vmatprep.mubr.f32.mxu0 0.0
        %900 = vmatmul.mubr.f32.gmra.mrb[0].mxu0 %v362
        %v901 = vpop.f32.mrb[0].mxu0
        %v902 = vadd.f32 0.0, %v901
        %v903 = vpop.f32.mrb[0].mxu0
        %v904 = vadd.f32 0.0, %v903
        %905 = vmatprep.mubr.f32.mxu0 0.0
        %906 = vmatmul.mubr.f32.gmra.mrb[0].mxu0 %v365
        %v907 = vpop.f32.mrb[0].mxu0
        %v908 = vadd.f32 0.0, %v907
        %v909 = vpop.f32.mrb[0].mxu0
        %v910 = vadd.f32 0.0, %v909
        %911 = vmatprep.mubr.f32.mxu0 0.0
        %912 = vmatmul.mubr.f32.gmra.mrb[0].mxu0 %v737
        %v913 = vpop.f32.mrb[0].mxu0
        %v914 = vadd.f32 0.0, %v913
        %v915 = vpop.f32.mrb[0].mxu0
        %v916 = vadd.f32 0.0, %v915
        %917 = vdwg.mxu0
        %v918 = vadd.f32 %v623, %v812
        %v919 = vadd.f32 %v625, %v814
        %v920 = vadd.f32 %v629, %v818
        %v921 = vadd.f32 %v631, %v820
        %v922 = vadd.f32 %v635, %v824
        %v923 = vadd.f32 %v637, %v826
        %v924 = vadd.f32 %v641, %v830
        %v925 = vadd.f32 %v643, %v832
        %v926 = vadd.f32 %v647, %v836
        %v927 = vadd.f32 %v649, %v838
        %v928 = vadd.f32 %v653, %v842
        %v929 = vadd.f32 %v655, %v844
        %v930 = vadd.f32 %v659, %v848
        %v931 = vadd.f32 %v661, %v850
        %v932 = vadd.f32 %v665, %v854
        %v933 = vadd.f32 %v667, %v856
        %v934 = vadd.f32 %v671, %v860
        %v935 = vadd.f32 %v673, %v862
        %v936 = vadd.f32 %v677, %v866
        %v937 = vadd.f32 %v679, %v868
        %v938 = vadd.f32 %v683, %v872
        %v939 = vadd.f32 %v685, %v874
        %v940 = vadd.f32 %v689, %v878
        %v941 = vadd.f32 %v691, %v880
        %v942 = vadd.f32 %v695, %v884
        %v943 = vadd.f32 %v697, %v886
        %v944 = vadd.f32 %v701, %v890
        %v945 = vadd.f32 %v703, %v892
        %v946 = vadd.f32 %v707, %v896
        %v947 = vadd.f32 %v709, %v898
        %v948 = vadd.f32 %v713, %v902
        %v949 = vadd.f32 %v715, %v904
        %v950 = vadd.f32 %v719, %v908
        %v951 = vadd.f32 %v721, %v910
        %v952 = vadd.f32 %v725, %v914
        %v953 = vadd.f32 %v727, %v916
        %v954 = vld [vmem:[%s2] sm:$0x3]
        %v956 = vlaneseq
        %v957 = vshrl.u32 %v956, 7
        %v958 = vsub.s32 0, %v957
        %v959 = vrot.slane %v954, %v958
        %v960 = vlaneseq
        %v961 = vshrl.u32 %v960, 7
        %v962 = vsub.s32 1, %v961
        %v963 = vrot.slane %v954, %v962
        %v966 = vadd.f32 %v918, %v959
        %v967 = vadd.f32 %v919, %v963
        %v968 = vadd.f32 %v920, %v959
        %v969 = vadd.f32 %v921, %v963
        %v970 = vadd.f32 %v922, %v959
        %v971 = vadd.f32 %v923, %v963
        %v972 = vadd.f32 %v924, %v959
        %v973 = vadd.f32 %v925, %v963
        %v974 = vadd.f32 %v926, %v959
        %v975 = vadd.f32 %v927, %v963
        %v976 = vadd.f32 %v928, %v959
        %v977 = vadd.f32 %v929, %v963
        %v978 = vadd.f32 %v930, %v959
        %v979 = vadd.f32 %v931, %v963
        %v980 = vadd.f32 %v932, %v959
        %v981 = vadd.f32 %v933, %v963
        %v982 = vadd.f32 %v934, %v959
        %v983 = vadd.f32 %v935, %v963
        %v984 = vadd.f32 %v936, %v959
        %v985 = vadd.f32 %v937, %v963
        %v986 = vadd.f32 %v938, %v959
        %v987 = vadd.f32 %v939, %v963
        %v988 = vadd.f32 %v940, %v959
        %v989 = vadd.f32 %v941, %v963
        %v990 = vadd.f32 %v942, %v959
        %v991 = vadd.f32 %v943, %v963
        %v992 = vadd.f32 %v944, %v959
        %v993 = vadd.f32 %v945, %v963
        %v994 = vadd.f32 %v946, %v959
        %v995 = vadd.f32 %v947, %v963
        %v996 = vadd.f32 %v948, %v959
        %v997 = vadd.f32 %v949, %v963
        %v998 = vadd.f32 %v950, %v959
        %v999 = vadd.f32 %v951, %v963
        %v1000 = vadd.f32 %v952, %v959
        %v1001 = vadd.f32 %v953, %v963
        %v1002 = vmax.f32 %v966, 0.0
        %v1003 = vmax.f32 %v967, 0.0
        %v1004 = vmax.f32 %v968, 0.0
        %v1005 = vmax.f32 %v969, 0.0
        %v1006 = vmax.f32 %v970, 0.0
        %v1007 = vmax.f32 %v971, 0.0
        %v1008 = vmax.f32 %v972, 0.0
        %v1009 = vmax.f32 %v973, 0.0
        %v1010 = vmax.f32 %v974, 0.0
        %v1011 = vmax.f32 %v975, 0.0
        %v1012 = vmax.f32 %v976, 0.0
        %v1013 = vmax.f32 %v977, 0.0
        %v1014 = vmax.f32 %v978, 0.0
        %v1015 = vmax.f32 %v979, 0.0
        %v1016 = vmax.f32 %v980, 0.0
        %v1017 = vmax.f32 %v981, 0.0
        %v1018 = vmax.f32 %v982, 0.0
        %v1019 = vmax.f32 %v983, 0.0
        %v1020 = vmax.f32 %v984, 0.0
        %v1021 = vmax.f32 %v985, 0.0
        %v1022 = vmax.f32 %v986, 0.0
        %v1023 = vmax.f32 %v987, 0.0
        %v1024 = vmax.f32 %v988, 0.0
        %v1025 = vmax.f32 %v989, 0.0
        %v1026 = vmax.f32 %v990, 0.0
        %v1027 = vmax.f32 %v991, 0.0
        %v1028 = vmax.f32 %v992, 0.0
        %v1029 = vmax.f32 %v993, 0.0
        %v1030 = vmax.f32 %v994, 0.0
        %v1031 = vmax.f32 %v995, 0.0
        %v1032 = vmax.f32 %v996, 0.0
        %v1033 = vmax.f32 %v997, 0.0
        %v1034 = vmax.f32 %v998, 0.0
        %v1035 = vmax.f32 %v999, 0.0
        %v1036 = vmax.f32 %v1000, 0.0
        %v1037 = vmax.f32 %v1001, 0.0
        %v1038 = vld [vmem:[%s3] sm:$0xff]
        %v1039 = vld [vmem:[%s3 + $0x8] sm:$0xff]
        %v1040 = vld [vmem:[%s3 + $0x10] sm:$0xff]
        %v1041 = vld [vmem:[%s3 + $0x18] sm:$0xff]
        %v1042 = vld [vmem:[%s3 + $0x20] sm:$0xff]
        %v1043 = vld [vmem:[%s3 + $0x28] sm:$0xff]
        %v1044 = vld [vmem:[%s3 + $0x30] sm:$0xff]
        %v1045 = vld [vmem:[%s3 + $0x38] sm:$0xff]
        %v1046 = vld [vmem:[%s3 + $0x40] sm:$0xff]
        %v1047 = vld [vmem:[%s3 + $0x48] sm:$0xff]
        %v1048 = vld [vmem:[%s3 + $0x50] sm:$0xff]
        %v1049 = vld [vmem:[%s3 + $0x58] sm:$0xff]
        %v1050 = vld [vmem:[%s3 + $0x60] sm:$0xff]
        %v1051 = vld [vmem:[%s3 + $0x68] sm:$0xff]
        %v1052 = vld [vmem:[%s3 + $0x70] sm:$0xff]
        %v1053 = vld [vmem:[%s3 + $0x78] sm:$0xff]
        %v1054 = vld [vmem:[%s3 + $0x80] sm:$0xff]
        %v1055 = vld [vmem:[%s3 + $0x88] sm:$0xff]
        %v1056 = vld [vmem:[%s3 + $0x90] sm:$0xff]
        %v1057 = vld [vmem:[%s3 + $0x98] sm:$0xff]
        %v1058 = vld [vmem:[%s3 + $0xa0] sm:$0xff]
        %v1059 = vld [vmem:[%s3 + $0xa8] sm:$0xff]
        %v1060 = vld [vmem:[%s3 + $0xb0] sm:$0xff]
        %v1061 = vld [vmem:[%s3 + $0xb8] sm:$0xff]
        %v1062 = vld [vmem:[%s3 + $0xc0] sm:$0xff]
        %v1063 = vld [vmem:[%s3 + $0xc8] sm:$0xff]
        %v1064 = vld [vmem:[%s3 + $0xd0] sm:$0xff]
        %v1065 = vld [vmem:[%s3 + $0xd8] sm:$0xff]
        %v1066 = vld [vmem:[%s3 + $0xe0] sm:$0xff]
        %v1067 = vld [vmem:[%s3 + $0xe8] sm:$0xff]
        %v1068 = vld [vmem:[%s3 + $0xf0] sm:$0xff]
        %v1069 = vld [vmem:[%s3 + $0xf8] sm:$0xff]
        %v1070 = vld [vmem:[%s3 + $0x100] sm:$0xff]
        %v1071 = vld [vmem:[%s3 + $0x108] sm:$0xff]
        %v1072 = vld [vmem:[%s3 + $0x110] sm:$0xff]
        %v1073 = vld [vmem:[%s3 + $0x118] sm:$0xff]
        %v1074 = vmul.f32 %v1002, %v1038
        %v1075 = vmul.f32 %v1003, %v1039
        %v1076 = vmul.f32 %v1004, %v1040
        %v1077 = vmul.f32 %v1005, %v1041
        %v1078 = vmul.f32 %v1006, %v1042
        %v1079 = vmul.f32 %v1007, %v1043
        %v1080 = vmul.f32 %v1008, %v1044
        %v1081 = vmul.f32 %v1009, %v1045
        %v1082 = vmul.f32 %v1010, %v1046
        %v1083 = vmul.f32 %v1011, %v1047
        %v1084 = vmul.f32 %v1012, %v1048
        %v1085 = vmul.f32 %v1013, %v1049
        %v1086 = vmul.f32 %v1014, %v1050
        %v1087 = vmul.f32 %v1015, %v1051
        %v1088 = vmul.f32 %v1016, %v1052
        %v1089 = vmul.f32 %v1017, %v1053
        %v1090 = vmul.f32 %v1018, %v1054
        %v1091 = vmul.f32 %v1019, %v1055
        %v1092 = vmul.f32 %v1020, %v1056
        %v1093 = vmul.f32 %v1021, %v1057
        %v1094 = vmul.f32 %v1022, %v1058
        %v1095 = vmul.f32 %v1023, %v1059
        %v1096 = vmul.f32 %v1024, %v1060
        %v1097 = vmul.f32 %v1025, %v1061
        %v1098 = vmul.f32 %v1026, %v1062
        %v1099 = vmul.f32 %v1027, %v1063
        %v1100 = vmul.f32 %v1028, %v1064
        %v1101 = vmul.f32 %v1029, %v1065
        %v1102 = vmul.f32 %v1030, %v1066
        %v1103 = vmul.f32 %v1031, %v1067
        %v1104 = vmul.f32 %v1032, %v1068
        %v1105 = vmul.f32 %v1033, %v1069
        %v1106 = vmul.f32 %v1034, %v1070
        %v1107 = vmul.f32 %v1035, %v1071
        %v1108 = vmul.f32 %v1036, %v1072
        %v1109 = vmul.f32 %v1037, %v1073
        %v1110 = vld [vmem:[%s4] sm:$0xff]
        %v1111 = vld [vmem:[%s4 + $0x8] sm:$0xff]
        %v1112 = vld [vmem:[%s4 + $0x10] sm:$0xff]
        %v1113 = vld [vmem:[%s4 + $0x18] sm:$0xff]
        %v1114 = vld [vmem:[%s4 + $0x20] sm:$0xff]
        %v1115 = vld [vmem:[%s4 + $0x28] sm:$0xff]
        %v1116 = vld [vmem:[%s4 + $0x30] sm:$0xff]
        %v1117 = vld [vmem:[%s4 + $0x38] sm:$0xff]
        %v1118 = vld [vmem:[%s4 + $0x40] sm:$0xff]
        %v1119 = vld [vmem:[%s4 + $0x48] sm:$0xff]
        %v1120 = vld [vmem:[%s4 + $0x50] sm:$0xff]
        %v1121 = vld [vmem:[%s4 + $0x58] sm:$0xff]
        %v1122 = vld [vmem:[%s4 + $0x60] sm:$0xff]
        %v1123 = vld [vmem:[%s4 + $0x68] sm:$0xff]
        %v1124 = vld [vmem:[%s4 + $0x70] sm:$0xff]
        %v1125 = vld [vmem:[%s4 + $0x78] sm:$0xff]
        %v1126 = vld [vmem:[%s4 + $0x80] sm:$0xff]
        %v1127 = vld [vmem:[%s4 + $0x88] sm:$0xff]
        %v1128 = vld [vmem:[%s4 + $0x90] sm:$0xff]
        %v1129 = vld [vmem:[%s4 + $0x98] sm:$0xff]
        %v1130 = vld [vmem:[%s4 + $0xa0] sm:$0xff]
        %v1131 = vld [vmem:[%s4 + $0xa8] sm:$0xff]
        %v1132 = vld [vmem:[%s4 + $0xb0] sm:$0xff]
        %v1133 = vld [vmem:[%s4 + $0xb8] sm:$0xff]
        %v1134 = vld [vmem:[%s4 + $0xc0] sm:$0xff]
        %v1135 = vld [vmem:[%s4 + $0xc8] sm:$0xff]
        %v1136 = vld [vmem:[%s4 + $0xd0] sm:$0xff]
        %v1137 = vld [vmem:[%s4 + $0xd8] sm:$0xff]
        %v1138 = vld [vmem:[%s4 + $0xe0] sm:$0xff]
        %v1139 = vld [vmem:[%s4 + $0xe8] sm:$0xff]
        %v1140 = vld [vmem:[%s4 + $0xf0] sm:$0xff]
        %v1141 = vld [vmem:[%s4 + $0xf8] sm:$0xff]
        %v1142 = vld [vmem:[%s4 + $0x100] sm:$0xff]
        %v1143 = vld [vmem:[%s4 + $0x108] sm:$0xff]
        %v1144 = vld [vmem:[%s4 + $0x110] sm:$0xff]
        %v1145 = vld [vmem:[%s4 + $0x118] sm:$0xff]
        %s1146 = scalar_lea.vmem %s4, 288
        %v1147 = vld [vmem:[%s1146] sm:$0xff]
        %v1148 = vld [vmem:[%s1146 + $0x8] sm:$0xff]
        %v1149 = vld [vmem:[%s1146 + $0x10] sm:$0xff]
        %v1150 = vld [vmem:[%s1146 + $0x18] sm:$0xff]
        %v1151 = vld [vmem:[%s1146 + $0x20] sm:$0xff]
        %v1152 = vld [vmem:[%s1146 + $0x28] sm:$0xff]
        %v1153 = vld [vmem:[%s1146 + $0x30] sm:$0xff]
        %v1154 = vld [vmem:[%s1146 + $0x38] sm:$0xff]
        %v1155 = vld [vmem:[%s1146 + $0x40] sm:$0xff]
        %v1156 = vld [vmem:[%s1146 + $0x48] sm:$0xff]
        %v1157 = vld [vmem:[%s1146 + $0x50] sm:$0xff]
        %v1158 = vld [vmem:[%s1146 + $0x58] sm:$0xff]
        %v1159 = vld [vmem:[%s1146 + $0x60] sm:$0xff]
        %v1160 = vld [vmem:[%s1146 + $0x68] sm:$0xff]
        %v1161 = vld [vmem:[%s1146 + $0x70] sm:$0xff]
        %v1162 = vld [vmem:[%s1146 + $0x78] sm:$0xff]
        %v1163 = vld [vmem:[%s1146 + $0x80] sm:$0xff]
        %v1164 = vld [vmem:[%s1146 + $0x88] sm:$0xff]
        %v1165 = vld [vmem:[%s1146 + $0x90] sm:$0xff]
        %v1166 = vld [vmem:[%s1146 + $0x98] sm:$0xff]
        %v1167 = vld [vmem:[%s1146 + $0xa0] sm:$0xff]
        %v1168 = vld [vmem:[%s1146 + $0xa8] sm:$0xff]
        %v1169 = vld [vmem:[%s1146 + $0xb0] sm:$0xff]
        %v1170 = vld [vmem:[%s1146 + $0xb8] sm:$0xff]
        %v1171 = vld [vmem:[%s1146 + $0xc0] sm:$0xff]
        %v1172 = vld [vmem:[%s1146 + $0xc8] sm:$0xff]
        %v1173 = vld [vmem:[%s1146 + $0xd0] sm:$0xff]
        %v1174 = vld [vmem:[%s1146 + $0xd8] sm:$0xff]
        %v1175 = vld [vmem:[%s1146 + $0xe0] sm:$0xff]
        %v1176 = vld [vmem:[%s1146 + $0xe8] sm:$0xff]
        %v1177 = vld [vmem:[%s1146 + $0xf0] sm:$0xff]
        %v1178 = vld [vmem:[%s1146 + $0xf8] sm:$0xff]
        %v1179 = vld [vmem:[%s1146 + $0x100] sm:$0xff]
        %v1180 = vld [vmem:[%s1146 + $0x108] sm:$0xff]
        %v1181 = vld [vmem:[%s1146 + $0x110] sm:$0xff]
        %v1182 = vld [vmem:[%s1146 + $0x118] sm:$0xff]
        %vm1183 = vcmask 130048
        %v1185 = vsel %vm1183, %v1077, 0
        %v1188 = vsel %vm1183, %v1079, 0
        %v1191 = vsel %vm1183, %v1081, 0
        %v1194 = vsel %vm1183, %v1083, 0
        %v1197 = vsel %vm1183, %v1085, 0
        %v1200 = vsel %vm1183, %v1087, 0
        %v1203 = vsel %vm1183, %v1089, 0
        %v1206 = vsel %vm1183, %v1091, 0
        %v1209 = vsel %vm1183, %v1093, 0
        %v1212 = vsel %vm1183, %v1095, 0
        %v1215 = vsel %vm1183, %v1097, 0
        %v1218 = vsel %vm1183, %v1099, 0
        %v1221 = vsel %vm1183, %v1101, 0
        %v1224 = vsel %vm1183, %v1103, 0
        %v1227 = vsel %vm1183, %v1105, 0
        %v1230 = vsel %vm1183, %v1107, 0
        %1232 = vmatprep.subr.mxu0 %v1148
        %1233 = vmatpush1.msra.mxu0 %v1147
        %1234 = vmatprep.subr.mxu0 %v1150
        %1235 = vmatpush1.msra.mxu0 %v1149
        %1236 = vmatprep.subr.mxu0 %v1152
        %1237 = vmatpush1.msra.mxu0 %v1151
        %1238 = vmatprep.subr.mxu0 %v1154
        %1239 = vmatpush1.msra.mxu0 %v1153
        %1240 = vmatprep.subr.mxu0 %v1156
        %1241 = vmatpush1.msra.mxu0 %v1155
        %1242 = vmatprep.subr.mxu0 %v1158
        %1243 = vmatpush1.msra.mxu0 %v1157
        %1244 = vmatprep.subr.mxu0 %v1160
        %1245 = vmatpush1.msra.mxu0 %v1159
        %1246 = vmatprep.subr.mxu0 %v1162
        %1247 = vmatpush1.msra.mxu0 %v1161
        %1248 = vmatprep.subr.mxu0 %v1164
        %1249 = vmatpush1.msra.mxu0 %v1163
        %1250 = vmatprep.subr.mxu0 %v1166
        %1251 = vmatpush1.msra.mxu0 %v1165
        %1252 = vmatprep.subr.mxu0 %v1168
        %1253 = vmatpush1.msra.mxu0 %v1167
        %1254 = vmatprep.subr.mxu0 %v1170
        %1255 = vmatpush1.msra.mxu0 %v1169
        %1256 = vmatprep.subr.mxu0 %v1172
        %1257 = vmatpush1.msra.mxu0 %v1171
        %1258 = vmatprep.subr.mxu0 %v1174
        %1259 = vmatpush1.msra.mxu0 %v1173
        %1260 = vmatprep.subr.mxu0 %v1176
        %1261 = vmatpush1.msra.mxu0 %v1175
        %1262 = vmatprep.subr.mxu0 %v1178
        %1263 = vmatpush1.msra.mxu0 %v1177
        %1264 = vmatprep.subr.mxu0 %v1180
        %1265 = vmatpush1.msra.mxu0 %v1179
        %1266 = vmatprep.subr.mxu0 %v1182
        %1267 = vmatpush1.msra.mxu0 %v1181
        %1268 = vmatprep.subr.mxu0 0.0
        %1269 = vmatpush1.msra.mxu0 0.0
        %1270 = vmatprep.subr.mxu0 0.0
        %1271 = vmatpush1.msra.mxu0 0.0
        %1272 = vmatprep.subr.mxu0 0.0
        %1273 = vmatpush1.msra.mxu0 0.0
        %1274 = vmatprep.subr.mxu0 0.0
        %1275 = vmatpush1.msra.mxu0 0.0
        %1276 = vmatprep.subr.mxu0 0.0
        %1277 = vmatpush1.msra.mxu0 0.0
        %1278 = vmatprep.subr.mxu0 0.0
        %1279 = vmatpush1.msra.mxu0 0.0
        %1280 = vmatprep.subr.mxu0 0.0
        %1281 = vmatpush1.msra.mxu0 0.0
        %1282 = vmatprep.subr.mxu0 0.0
        %1283 = vmatpush1.msra.mxu0 0.0
        %1284 = vmatprep.subr.mxu0 0.0
        %1285 = vmatpush1.msra.mxu0 0.0
        %1286 = vmatprep.subr.mxu0 0.0
        %1287 = vmatpush1.msra.mxu0 0.0
        %1288 = vmatprep.subr.mxu0 0.0
        %1289 = vmatpush1.msra.mxu0 0.0
        %1290 = vmatprep.subr.mxu0 0.0
        %1291 = vmatpush1.msra.mxu0 0.0
        %1292 = vmatprep.subr.mxu0 0.0
        %1293 = vmatpush1.msra.mxu0 0.0
        %1294 = vmatprep.subr.mxu0 0.0
        %1295 = vmatpush1.msra.mxu0 0.0
        %1296 = vmatprep.mubr.f32.mxu0 %v1185
        %1297 = vmatmul.mubr.f32.gmra.mrb[0].mxu0 %v1076
        %v1298 = vpop.f32.mrb[0].mxu0
        %v1299 = vadd.f32 0.0, %v1298
        %v1300 = vpop.f32.mrb[0].mxu0
        %v1301 = vadd.f32 0.0, %v1300
        %1302 = vmatprep.mubr.f32.mxu0 %v1188
        %1303 = vmatmul.mubr.f32.gmra.mrb[0].mxu0 %v1078
        %v1304 = vpop.f32.mrb[0].mxu0
        %v1305 = vadd.f32 0.0, %v1304
        %v1306 = vpop.f32.mrb[0].mxu0
        %v1307 = vadd.f32 0.0, %v1306
        %1308 = vmatprep.mubr.f32.mxu0 %v1191
        %1309 = vmatmul.mubr.f32.gmra.mrb[0].mxu0 %v1080
        %v1310 = vpop.f32.mrb[0].mxu0
        %v1311 = vadd.f32 0.0, %v1310
        %v1312 = vpop.f32.mrb[0].mxu0
        %v1313 = vadd.f32 0.0, %v1312
        %1314 = vmatprep.mubr.f32.mxu0 %v1194
        %1315 = vmatmul.mubr.f32.gmra.mrb[0].mxu0 %v1082
        %v1316 = vpop.f32.mrb[0].mxu0
        %v1317 = vadd.f32 0.0, %v1316
        %v1318 = vpop.f32.mrb[0].mxu0
        %v1319 = vadd.f32 0.0, %v1318
        %1320 = vmatprep.mubr.f32.mxu0 %v1197
        %1321 = vmatmul.mubr.f32.gmra.mrb[0].mxu0 %v1084
        %v1322 = vpop.f32.mrb[0].mxu0
        %v1323 = vadd.f32 0.0, %v1322
        %v1324 = vpop.f32.mrb[0].mxu0
        %v1325 = vadd.f32 0.0, %v1324
        %1326 = vmatprep.mubr.f32.mxu0 %v1200
        %1327 = vmatmul.mubr.f32.gmra.mrb[0].mxu0 %v1086
        %v1328 = vpop.f32.mrb[0].mxu0
        %v1329 = vadd.f32 0.0, %v1328
        %v1330 = vpop.f32.mrb[0].mxu0
        %v1331 = vadd.f32 0.0, %v1330
        %1332 = vmatprep.mubr.f32.mxu0 %v1203
        %1333 = vmatmul.mubr.f32.gmra.mrb[0].mxu0 %v1088
        %v1334 = vpop.f32.mrb[0].mxu0
        %v1335 = vadd.f32 0.0, %v1334
        %v1336 = vpop.f32.mrb[0].mxu0
        %v1337 = vadd.f32 0.0, %v1336
        %1338 = vmatprep.mubr.f32.mxu0 %v1206
        %1339 = vmatmul.mubr.f32.gmra.mrb[0].mxu0 %v1090
        %v1340 = vpop.f32.mrb[0].mxu0
        %v1341 = vadd.f32 0.0, %v1340
        %v1342 = vpop.f32.mrb[0].mxu0
        %v1343 = vadd.f32 0.0, %v1342
        %1344 = vmatprep.mubr.f32.mxu0 %v1209
        %1345 = vmatmul.mubr.f32.gmra.mrb[0].mxu0 %v1092
        %v1346 = vpop.f32.mrb[0].mxu0
        %v1347 = vadd.f32 0.0, %v1346
        %v1348 = vpop.f32.mrb[0].mxu0
        %v1349 = vadd.f32 0.0, %v1348
        %1350 = vmatprep.mubr.f32.mxu0 %v1212
        %1351 = vmatmul.mubr.f32.gmra.mrb[0].mxu0 %v1094
        %v1352 = vpop.f32.mrb[0].mxu0
        %v1353 = vadd.f32 0.0, %v1352
        %v1354 = vpop.f32.mrb[0].mxu0
        %v1355 = vadd.f32 0.0, %v1354
        %1356 = vmatprep.mubr.f32.mxu0 %v1215
        %1357 = vmatmul.mubr.f32.gmra.mrb[0].mxu0 %v1096
        %v1358 = vpop.f32.mrb[0].mxu0
        %v1359 = vadd.f32 0.0, %v1358
        %v1360 = vpop.f32.mrb[0].mxu0
        %v1361 = vadd.f32 0.0, %v1360
        %1362 = vmatprep.mubr.f32.mxu0 %v1218
        %1363 = vmatmul.mubr.f32.gmra.mrb[0].mxu0 %v1098
        %v1364 = vpop.f32.mrb[0].mxu0
        %v1365 = vadd.f32 0.0, %v1364
        %v1366 = vpop.f32.mrb[0].mxu0
        %v1367 = vadd.f32 0.0, %v1366
        %1368 = vmatprep.mubr.f32.mxu0 %v1221
        %1369 = vmatmul.mubr.f32.gmra.mrb[0].mxu0 %v1100
        %v1370 = vpop.f32.mrb[0].mxu0
        %v1371 = vadd.f32 0.0, %v1370
        %v1372 = vpop.f32.mrb[0].mxu0
        %v1373 = vadd.f32 0.0, %v1372
        %1374 = vmatprep.mubr.f32.mxu0 %v1224
        %1375 = vmatmul.mubr.f32.gmra.mrb[0].mxu0 %v1102
        %v1376 = vpop.f32.mrb[0].mxu0
        %v1377 = vadd.f32 0.0, %v1376
        %v1378 = vpop.f32.mrb[0].mxu0
        %v1379 = vadd.f32 0.0, %v1378
        %1380 = vmatprep.mubr.f32.mxu0 %v1227
        %1381 = vmatmul.mubr.f32.gmra.mrb[0].mxu0 %v1104
        %v1382 = vpop.f32.mrb[0].mxu0
        %v1383 = vadd.f32 0.0, %v1382
        %v1384 = vpop.f32.mrb[0].mxu0
        %v1385 = vadd.f32 0.0, %v1384
        %1386 = vmatprep.mubr.f32.mxu0 %v1230
        %1387 = vmatmul.mubr.f32.gmra.mrb[0].mxu0 %v1106
        %v1388 = vpop.f32.mrb[0].mxu0
        %v1389 = vadd.f32 0.0, %v1388
        %v1390 = vpop.f32.mrb[0].mxu0
        %v1391 = vadd.f32 0.0, %v1390
        %1392 = vdwg.mxu0
        %v1394 = vsel %vm1183, %v1075, 0
        %1396 = vmatprep.subr.mxu0 %v1111
        %1397 = vmatpush1.msra.mxu0 %v1110
        %1398 = vmatprep.subr.mxu0 %v1113
        %1399 = vmatpush1.msra.mxu0 %v1112
        %1400 = vmatprep.subr.mxu0 %v1115
        %1401 = vmatpush1.msra.mxu0 %v1114
        %1402 = vmatprep.subr.mxu0 %v1117
        %1403 = vmatpush1.msra.mxu0 %v1116
        %1404 = vmatprep.subr.mxu0 %v1119
        %1405 = vmatpush1.msra.mxu0 %v1118
        %1406 = vmatprep.subr.mxu0 %v1121
        %1407 = vmatpush1.msra.mxu0 %v1120
        %1408 = vmatprep.subr.mxu0 %v1123
        %1409 = vmatpush1.msra.mxu0 %v1122
        %1410 = vmatprep.subr.mxu0 %v1125
        %1411 = vmatpush1.msra.mxu0 %v1124
        %1412 = vmatprep.subr.mxu0 %v1127
        %1413 = vmatpush1.msra.mxu0 %v1126
        %1414 = vmatprep.subr.mxu0 %v1129
        %1415 = vmatpush1.msra.mxu0 %v1128
        %1416 = vmatprep.subr.mxu0 %v1131
        %1417 = vmatpush1.msra.mxu0 %v1130
        %1418 = vmatprep.subr.mxu0 %v1133
        %1419 = vmatpush1.msra.mxu0 %v1132
        %1420 = vmatprep.subr.mxu0 %v1135
        %1421 = vmatpush1.msra.mxu0 %v1134
        %1422 = vmatprep.subr.mxu0 %v1137
        %1423 = vmatpush1.msra.mxu0 %v1136
        %1424 = vmatprep.subr.mxu0 %v1139
        %1425 = vmatpush1.msra.mxu0 %v1138
        %1426 = vmatprep.subr.mxu0 %v1141
        %1427 = vmatpush1.msra.mxu0 %v1140
        %1428 = vmatprep.subr.mxu0 %v1143
        %1429 = vmatpush1.msra.mxu0 %v1142
        %1430 = vmatprep.subr.mxu0 %v1145
        %1431 = vmatpush1.msra.mxu0 %v1144
        %1432 = vmatprep.subr.mxu0 0.0
        %1433 = vmatpush1.msra.mxu0 0.0
        %1434 = vmatprep.subr.mxu0 0.0
        %1435 = vmatpush1.msra.mxu0 0.0
        %1436 = vmatprep.subr.mxu0 0.0
        %1437 = vmatpush1.msra.mxu0 0.0
        %1438 = vmatprep.subr.mxu0 0.0
        %1439 = vmatpush1.msra.mxu0 0.0
        %1440 = vmatprep.subr.mxu0 0.0
        %1441 = vmatpush1.msra.mxu0 0.0
        %1442 = vmatprep.subr.mxu0 0.0
        %1443 = vmatpush1.msra.mxu0 0.0
        %1444 = vmatprep.subr.mxu0 0.0
        %1445 = vmatpush1.msra.mxu0 0.0
        %1446 = vmatprep.subr.mxu0 0.0
        %1447 = vmatpush1.msra.mxu0 0.0
        %1448 = vmatprep.subr.mxu0 0.0
        %1449 = vmatpush1.msra.mxu0 0.0
        %1450 = vmatprep.subr.mxu0 0.0
        %1451 = vmatpush1.msra.mxu0 0.0
        %1452 = vmatprep.subr.mxu0 0.0
        %1453 = vmatpush1.msra.mxu0 0.0
        %1454 = vmatprep.subr.mxu0 0.0
        %1455 = vmatpush1.msra.mxu0 0.0
        %1456 = vmatprep.subr.mxu0 0.0
        %1457 = vmatpush1.msra.mxu0 0.0
        %1458 = vmatprep.subr.mxu0 0.0
        %1459 = vmatpush1.msra.mxu0 0.0
        %1460 = vmatprep.mubr.f32.mxu0 %v1394
        %1461 = vmatmul.mubr.f32.gmra.mrb[0].mxu0 %v1074
        %v1462 = vpop.f32.mrb[0].mxu0
        %v1463 = vadd.f32 %v1299, %v1462
        %v1464 = vpop.f32.mrb[0].mxu0
        %v1465 = vadd.f32 %v1301, %v1464
        %1466 = vmatprep.mubr.f32.mxu0 %v1185
        %1467 = vmatmul.mubr.f32.gmra.mrb[0].mxu0 %v1076
        %v1468 = vpop.f32.mrb[0].mxu0
        %v1469 = vadd.f32 %v1305, %v1468
        %v1470 = vpop.f32.mrb[0].mxu0
        %v1471 = vadd.f32 %v1307, %v1470
        %1472 = vmatprep.mubr.f32.mxu0 %v1188
        %1473 = vmatmul.mubr.f32.gmra.mrb[0].mxu0 %v1078
        %v1474 = vpop.f32.mrb[0].mxu0
        %v1475 = vadd.f32 %v1311, %v1474
        %v1476 = vpop.f32.mrb[0].mxu0
        %v1477 = vadd.f32 %v1313, %v1476
        %1478 = vmatprep.mubr.f32.mxu0 %v1191
        %1479 = vmatmul.mubr.f32.gmra.mrb[0].mxu0 %v1080
        %v1480 = vpop.f32.mrb[0].mxu0
        %v1481 = vadd.f32 %v1317, %v1480
        %v1482 = vpop.f32.mrb[0].mxu0
        %v1483 = vadd.f32 %v1319, %v1482
        %1484 = vmatprep.mubr.f32.mxu0 %v1194
        %1485 = vmatmul.mubr.f32.gmra.mrb[0].mxu0 %v1082
        %v1486 = vpop.f32.mrb[0].mxu0
        %v1487 = vadd.f32 %v1323, %v1486
        %v1488 = vpop.f32.mrb[0].mxu0
        %v1489 = vadd.f32 %v1325, %v1488
        %1490 = vmatprep.mubr.f32.mxu0 %v1197
        %1491 = vmatmul.mubr.f32.gmra.mrb[0].mxu0 %v1084
        %v1492 = vpop.f32.mrb[0].mxu0
        %v1493 = vadd.f32 %v1329, %v1492
        %v1494 = vpop.f32.mrb[0].mxu0
        %v1495 = vadd.f32 %v1331, %v1494
        %1496 = vmatprep.mubr.f32.mxu0 %v1200
        %1497 = vmatmul.mubr.f32.gmra.mrb[0].mxu0 %v1086
        %v1498 = vpop.f32.mrb[0].mxu0
        %v1499 = vadd.f32 %v1335, %v1498
        %v1500 = vpop.f32.mrb[0].mxu0
        %v1501 = vadd.f32 %v1337, %v1500
        %1502 = vmatprep.mubr.f32.mxu0 %v1203
        %1503 = vmatmul.mubr.f32.gmra.mrb[0].mxu0 %v1088
        %v1504 = vpop.f32.mrb[0].mxu0
        %v1505 = vadd.f32 %v1341, %v1504
        %v1506 = vpop.f32.mrb[0].mxu0
        %v1507 = vadd.f32 %v1343, %v1506
        %1508 = vmatprep.mubr.f32.mxu0 %v1206
        %1509 = vmatmul.mubr.f32.gmra.mrb[0].mxu0 %v1090
        %v1510 = vpop.f32.mrb[0].mxu0
        %v1511 = vadd.f32 %v1347, %v1510
        %v1512 = vpop.f32.mrb[0].mxu0
        %v1513 = vadd.f32 %v1349, %v1512
        %1514 = vmatprep.mubr.f32.mxu0 %v1209
        %1515 = vmatmul.mubr.f32.gmra.mrb[0].mxu0 %v1092
        %v1516 = vpop.f32.mrb[0].mxu0
        %v1517 = vadd.f32 %v1353, %v1516
        %v1518 = vpop.f32.mrb[0].mxu0
        %v1519 = vadd.f32 %v1355, %v1518
        %1520 = vmatprep.mubr.f32.mxu0 %v1212
        %1521 = vmatmul.mubr.f32.gmra.mrb[0].mxu0 %v1094
        %v1522 = vpop.f32.mrb[0].mxu0
        %v1523 = vadd.f32 %v1359, %v1522
        %v1524 = vpop.f32.mrb[0].mxu0
        %v1525 = vadd.f32 %v1361, %v1524
        %1526 = vmatprep.mubr.f32.mxu0 %v1215
        %1527 = vmatmul.mubr.f32.gmra.mrb[0].mxu0 %v1096
        %v1528 = vpop.f32.mrb[0].mxu0
        %v1529 = vadd.f32 %v1365, %v1528
        %v1530 = vpop.f32.mrb[0].mxu0
        %v1531 = vadd.f32 %v1367, %v1530
        %1532 = vmatprep.mubr.f32.mxu0 %v1218
        %1533 = vmatmul.mubr.f32.gmra.mrb[0].mxu0 %v1098
        %v1534 = vpop.f32.mrb[0].mxu0
        %v1535 = vadd.f32 %v1371, %v1534
        %v1536 = vpop.f32.mrb[0].mxu0
        %v1537 = vadd.f32 %v1373, %v1536
        %1538 = vmatprep.mubr.f32.mxu0 %v1221
        %1539 = vmatmul.mubr.f32.gmra.mrb[0].mxu0 %v1100
        %v1540 = vpop.f32.mrb[0].mxu0
        %v1541 = vadd.f32 %v1377, %v1540
        %v1542 = vpop.f32.mrb[0].mxu0
        %v1543 = vadd.f32 %v1379, %v1542
        %1544 = vmatprep.mubr.f32.mxu0 %v1224
        %1545 = vmatmul.mubr.f32.gmra.mrb[0].mxu0 %v1102
        %v1546 = vpop.f32.mrb[0].mxu0
        %v1547 = vadd.f32 %v1383, %v1546
        %v1548 = vpop.f32.mrb[0].mxu0
        %v1549 = vadd.f32 %v1385, %v1548
        %1550 = vmatprep.mubr.f32.mxu0 %v1227
        %1551 = vmatmul.mubr.f32.gmra.mrb[0].mxu0 %v1104
        %v1552 = vpop.f32.mrb[0].mxu0
        %v1553 = vadd.f32 %v1389, %v1552
        %v1554 = vpop.f32.mrb[0].mxu0
        %v1555 = vadd.f32 %v1391, %v1554
        %1556 = vdwg.mxu0
        %s1557 = scalar_lea.vmem %s4, 576
        %v1558 = vld [vmem:[%s1557] sm:$0xff]
        %v1559 = vld [vmem:[%s1557 + $0x8] sm:$0xff]
        %v1560 = vld [vmem:[%s1557 + $0x10] sm:$0xff]
        %v1561 = vld [vmem:[%s1557 + $0x18] sm:$0xff]
        %v1562 = vld [vmem:[%s1557 + $0x20] sm:$0xff]
        %v1563 = vld [vmem:[%s1557 + $0x28] sm:$0xff]
        %v1564 = vld [vmem:[%s1557 + $0x30] sm:$0xff]
        %v1565 = vld [vmem:[%s1557 + $0x38] sm:$0xff]
        %v1566 = vld [vmem:[%s1557 + $0x40] sm:$0xff]
        %v1567 = vld [vmem:[%s1557 + $0x48] sm:$0xff]
        %v1568 = vld [vmem:[%s1557 + $0x50] sm:$0xff]
        %v1569 = vld [vmem:[%s1557 + $0x58] sm:$0xff]
        %v1570 = vld [vmem:[%s1557 + $0x60] sm:$0xff]
        %v1571 = vld [vmem:[%s1557 + $0x68] sm:$0xff]
        %v1572 = vld [vmem:[%s1557 + $0x70] sm:$0xff]
        %v1573 = vld [vmem:[%s1557 + $0x78] sm:$0xff]
        %v1574 = vld [vmem:[%s1557 + $0x80] sm:$0xff]
        %v1575 = vld [vmem:[%s1557 + $0x88] sm:$0xff]
        %v1576 = vld [vmem:[%s1557 + $0x90] sm:$0xff]
        %v1577 = vld [vmem:[%s1557 + $0x98] sm:$0xff]
        %v1578 = vld [vmem:[%s1557 + $0xa0] sm:$0xff]
        %v1579 = vld [vmem:[%s1557 + $0xa8] sm:$0xff]
        %v1580 = vld [vmem:[%s1557 + $0xb0] sm:$0xff]
        %v1581 = vld [vmem:[%s1557 + $0xb8] sm:$0xff]
        %v1582 = vld [vmem:[%s1557 + $0xc0] sm:$0xff]
        %v1583 = vld [vmem:[%s1557 + $0xc8] sm:$0xff]
        %v1584 = vld [vmem:[%s1557 + $0xd0] sm:$0xff]
        %v1585 = vld [vmem:[%s1557 + $0xd8] sm:$0xff]
        %v1586 = vld [vmem:[%s1557 + $0xe0] sm:$0xff]
        %v1587 = vld [vmem:[%s1557 + $0xe8] sm:$0xff]
        %v1588 = vld [vmem:[%s1557 + $0xf0] sm:$0xff]
        %v1589 = vld [vmem:[%s1557 + $0xf8] sm:$0xff]
        %v1590 = vld [vmem:[%s1557 + $0x100] sm:$0xff]
        %v1591 = vld [vmem:[%s1557 + $0x108] sm:$0xff]
        %v1592 = vld [vmem:[%s1557 + $0x110] sm:$0xff]
        %v1593 = vld [vmem:[%s1557 + $0x118] sm:$0xff]
        %v1595 = vsel %vm1183, %v1109, 0
        %1597 = vmatprep.subr.mxu0 %v1559
        %1598 = vmatpush1.msra.mxu0 %v1558
        %1599 = vmatprep.subr.mxu0 %v1561
        %1600 = vmatpush1.msra.mxu0 %v1560
        %1601 = vmatprep.subr.mxu0 %v1563
        %1602 = vmatpush1.msra.mxu0 %v1562
        %1603 = vmatprep.subr.mxu0 %v1565
        %1604 = vmatpush1.msra.mxu0 %v1564
        %1605 = vmatprep.subr.mxu0 %v1567
        %1606 = vmatpush1.msra.mxu0 %v1566
        %1607 = vmatprep.subr.mxu0 %v1569
        %1608 = vmatpush1.msra.mxu0 %v1568
        %1609 = vmatprep.subr.mxu0 %v1571
        %1610 = vmatpush1.msra.mxu0 %v1570
        %1611 = vmatprep.subr.mxu0 %v1573
        %1612 = vmatpush1.msra.mxu0 %v1572
        %1613 = vmatprep.subr.mxu0 %v1575
        %1614 = vmatpush1.msra.mxu0 %v1574
        %1615 = vmatprep.subr.mxu0 %v1577
        %1616 = vmatpush1.msra.mxu0 %v1576
        %1617 = vmatprep.subr.mxu0 %v1579
        %1618 = vmatpush1.msra.mxu0 %v1578
        %1619 = vmatprep.subr.mxu0 %v1581
        %1620 = vmatpush1.msra.mxu0 %v1580
        %1621 = vmatprep.subr.mxu0 %v1583
        %1622 = vmatpush1.msra.mxu0 %v1582
        %1623 = vmatprep.subr.mxu0 %v1585
        %1624 = vmatpush1.msra.mxu0 %v1584
        %1625 = vmatprep.subr.mxu0 %v1587
        %1626 = vmatpush1.msra.mxu0 %v1586
        %1627 = vmatprep.subr.mxu0 %v1589
        %1628 = vmatpush1.msra.mxu0 %v1588
        %1629 = vmatprep.subr.mxu0 %v1591
        %1630 = vmatpush1.msra.mxu0 %v1590
        %1631 = vmatprep.subr.mxu0 %v1593
        %1632 = vmatpush1.msra.mxu0 %v1592
        %1633 = vmatprep.subr.mxu0 0.0
        %1634 = vmatpush1.msra.mxu0 0.0
        %1635 = vmatprep.subr.mxu0 0.0
        %1636 = vmatpush1.msra.mxu0 0.0
        %1637 = vmatprep.subr.mxu0 0.0
        %1638 = vmatpush1.msra.mxu0 0.0
        %1639 = vmatprep.subr.mxu0 0.0
        %1640 = vmatpush1.msra.mxu0 0.0
        %1641 = vmatprep.subr.mxu0 0.0
        %1642 = vmatpush1.msra.mxu0 0.0
        %1643 = vmatprep.subr.mxu0 0.0
        %1644 = vmatpush1.msra.mxu0 0.0
        %1645 = vmatprep.subr.mxu0 0.0
        %1646 = vmatpush1.msra.mxu0 0.0
        %1647 = vmatprep.subr.mxu0 0.0
        %1648 = vmatpush1.msra.mxu0 0.0
        %1649 = vmatprep.subr.mxu0 0.0
        %1650 = vmatpush1.msra.mxu0 0.0
        %1651 = vmatprep.subr.mxu0 0.0
        %1652 = vmatpush1.msra.mxu0 0.0
        %1653 = vmatprep.subr.mxu0 0.0
        %1654 = vmatpush1.msra.mxu0 0.0
        %1655 = vmatprep.subr.mxu0 0.0
        %1656 = vmatpush1.msra.mxu0 0.0
        %1657 = vmatprep.subr.mxu0 0.0
        %1658 = vmatpush1.msra.mxu0 0.0
        %1659 = vmatprep.subr.mxu0 0.0
        %1660 = vmatpush1.msra.mxu0 0.0
        %1661 = vmatprep.mubr.f32.mxu0 %v1188
        %1662 = vmatmul.mubr.f32.gmra.mrb[0].mxu0 %v1078
        %v1663 = vpop.f32.mrb[0].mxu0
        %v1664 = vadd.f32 0.0, %v1663
        %v1665 = vpop.f32.mrb[0].mxu0
        %v1666 = vadd.f32 0.0, %v1665
        %1667 = vmatprep.mubr.f32.mxu0 %v1191
        %1668 = vmatmul.mubr.f32.gmra.mrb[0].mxu0 %v1080
        %v1669 = vpop.f32.mrb[0].mxu0
        %v1670 = vadd.f32 0.0, %v1669
        %v1671 = vpop.f32.mrb[0].mxu0
        %v1672 = vadd.f32 0.0, %v1671
        %1673 = vmatprep.mubr.f32.mxu0 %v1194
        %1674 = vmatmul.mubr.f32.gmra.mrb[0].mxu0 %v1082
        %v1675 = vpop.f32.mrb[0].mxu0
        %v1676 = vadd.f32 0.0, %v1675
        %v1677 = vpop.f32.mrb[0].mxu0
        %v1678 = vadd.f32 0.0, %v1677
        %1679 = vmatprep.mubr.f32.mxu0 %v1197
        %1680 = vmatmul.mubr.f32.gmra.mrb[0].mxu0 %v1084
        %v1681 = vpop.f32.mrb[0].mxu0
        %v1682 = vadd.f32 0.0, %v1681
        %v1683 = vpop.f32.mrb[0].mxu0
        %v1684 = vadd.f32 0.0, %v1683
        %1685 = vmatprep.mubr.f32.mxu0 %v1200
        %1686 = vmatmul.mubr.f32.gmra.mrb[0].mxu0 %v1086
        %v1687 = vpop.f32.mrb[0].mxu0
        %v1688 = vadd.f32 0.0, %v1687
        %v1689 = vpop.f32.mrb[0].mxu0
        %v1690 = vadd.f32 0.0, %v1689
        %1691 = vmatprep.mubr.f32.mxu0 %v1203
        %1692 = vmatmul.mubr.f32.gmra.mrb[0].mxu0 %v1088
        %v1693 = vpop.f32.mrb[0].mxu0
        %v1694 = vadd.f32 0.0, %v1693
        %v1695 = vpop.f32.mrb[0].mxu0
        %v1696 = vadd.f32 0.0, %v1695
        %1697 = vmatprep.mubr.f32.mxu0 %v1206
        %1698 = vmatmul.mubr.f32.gmra.mrb[0].mxu0 %v1090
        %v1699 = vpop.f32.mrb[0].mxu0
        %v1700 = vadd.f32 0.0, %v1699
        %v1701 = vpop.f32.mrb[0].mxu0
        %v1702 = vadd.f32 0.0, %v1701
        %1703 = vmatprep.mubr.f32.mxu0 %v1209
        %1704 = vmatmul.mubr.f32.gmra.mrb[0].mxu0 %v1092
        %v1705 = vpop.f32.mrb[0].mxu0
        %v1706 = vadd.f32 0.0, %v1705
        %v1707 = vpop.f32.mrb[0].mxu0
        %v1708 = vadd.f32 0.0, %v1707
        %1709 = vmatprep.mubr.f32.mxu0 %v1212
        %1710 = vmatmul.mubr.f32.gmra.mrb[0].mxu0 %v1094
        %v1711 = vpop.f32.mrb[0].mxu0
        %v1712 = vadd.f32 0.0, %v1711
        %v1713 = vpop.f32.mrb[0].mxu0
        %v1714 = vadd.f32 0.0, %v1713
        %1715 = vmatprep.mubr.f32.mxu0 %v1215
        %1716 = vmatmul.mubr.f32.gmra.mrb[0].mxu0 %v1096
        %v1717 = vpop.f32.mrb[0].mxu0
        %v1718 = vadd.f32 0.0, %v1717
        %v1719 = vpop.f32.mrb[0].mxu0
        %v1720 = vadd.f32 0.0, %v1719
        %1721 = vmatprep.mubr.f32.mxu0 %v1218
        %1722 = vmatmul.mubr.f32.gmra.mrb[0].mxu0 %v1098
        %v1723 = vpop.f32.mrb[0].mxu0
        %v1724 = vadd.f32 0.0, %v1723
        %v1725 = vpop.f32.mrb[0].mxu0
        %v1726 = vadd.f32 0.0, %v1725
        %1727 = vmatprep.mubr.f32.mxu0 %v1221
        %1728 = vmatmul.mubr.f32.gmra.mrb[0].mxu0 %v1100
        %v1729 = vpop.f32.mrb[0].mxu0
        %v1730 = vadd.f32 0.0, %v1729
        %v1731 = vpop.f32.mrb[0].mxu0
        %v1732 = vadd.f32 0.0, %v1731
        %1733 = vmatprep.mubr.f32.mxu0 %v1224
        %1734 = vmatmul.mubr.f32.gmra.mrb[0].mxu0 %v1102
        %v1735 = vpop.f32.mrb[0].mxu0
        %v1736 = vadd.f32 0.0, %v1735
        %v1737 = vpop.f32.mrb[0].mxu0
        %v1738 = vadd.f32 0.0, %v1737
        %1739 = vmatprep.mubr.f32.mxu0 %v1227
        %1740 = vmatmul.mubr.f32.gmra.mrb[0].mxu0 %v1104
        %v1741 = vpop.f32.mrb[0].mxu0
        %v1742 = vadd.f32 0.0, %v1741
        %v1743 = vpop.f32.mrb[0].mxu0
        %v1744 = vadd.f32 0.0, %v1743
        %1745 = vmatprep.mubr.f32.mxu0 %v1230
        %1746 = vmatmul.mubr.f32.gmra.mrb[0].mxu0 %v1106
        %v1747 = vpop.f32.mrb[0].mxu0
        %v1748 = vadd.f32 0.0, %v1747
        %v1749 = vpop.f32.mrb[0].mxu0
        %v1750 = vadd.f32 0.0, %v1749
        %1751 = vmatprep.mubr.f32.mxu0 %v1595
        %1752 = vmatmul.mubr.f32.gmra.mrb[0].mxu0 %v1108
        %v1753 = vpop.f32.mrb[0].mxu0
        %v1754 = vadd.f32 0.0, %v1753
        %v1755 = vpop.f32.mrb[0].mxu0
        %v1756 = vadd.f32 0.0, %v1755
        %1757 = vdwg.mxu0
        %v1758 = vadd.f32 %v1463, %v1664
        %v1759 = vadd.f32 %v1465, %v1666
        %v1760 = vadd.f32 %v1469, %v1670
        %v1761 = vadd.f32 %v1471, %v1672
        %v1762 = vadd.f32 %v1475, %v1676
        %v1763 = vadd.f32 %v1477, %v1678
        %v1764 = vadd.f32 %v1481, %v1682
        %v1765 = vadd.f32 %v1483, %v1684
        %v1766 = vadd.f32 %v1487, %v1688
        %v1767 = vadd.f32 %v1489, %v1690
        %v1768 = vadd.f32 %v1493, %v1694
        %v1769 = vadd.f32 %v1495, %v1696
        %v1770 = vadd.f32 %v1499, %v1700
        %v1771 = vadd.f32 %v1501, %v1702
        %v1772 = vadd.f32 %v1505, %v1706
        %v1773 = vadd.f32 %v1507, %v1708
        %v1774 = vadd.f32 %v1511, %v1712
        %v1775 = vadd.f32 %v1513, %v1714
        %v1776 = vadd.f32 %v1517, %v1718
        %v1777 = vadd.f32 %v1519, %v1720
        %v1778 = vadd.f32 %v1523, %v1724
        %v1779 = vadd.f32 %v1525, %v1726
        %v1780 = vadd.f32 %v1529, %v1730
        %v1781 = vadd.f32 %v1531, %v1732
        %v1782 = vadd.f32 %v1535, %v1736
        %v1783 = vadd.f32 %v1537, %v1738
        %v1784 = vadd.f32 %v1541, %v1742
        %v1785 = vadd.f32 %v1543, %v1744
        %v1786 = vadd.f32 %v1547, %v1748
        %v1787 = vadd.f32 %v1549, %v1750
        %v1788 = vadd.f32 %v1553, %v1754
        %v1789 = vadd.f32 %v1555, %v1756
        %v1790 = vld [vmem:[%s5] sm:$0x3]
        %v1792 = vlaneseq
        %v1793 = vshrl.u32 %v1792, 7
        %v1794 = vsub.s32 0, %v1793
        %v1795 = vrot.slane %v1790, %v1794
        %v1796 = vlaneseq
        %v1797 = vshrl.u32 %v1796, 7
        %v1798 = vsub.s32 1, %v1797
        %v1799 = vrot.slane %v1790, %v1798
        %v1802 = vadd.f32 %v1758, %v1795
        %v1803 = vadd.f32 %v1759, %v1799
        %v1804 = vadd.f32 %v1760, %v1795
        %v1805 = vadd.f32 %v1761, %v1799
        %v1806 = vadd.f32 %v1762, %v1795
        %v1807 = vadd.f32 %v1763, %v1799
        %v1808 = vadd.f32 %v1764, %v1795
        %v1809 = vadd.f32 %v1765, %v1799
        %v1810 = vadd.f32 %v1766, %v1795
        %v1811 = vadd.f32 %v1767, %v1799
        %v1812 = vadd.f32 %v1768, %v1795
        %v1813 = vadd.f32 %v1769, %v1799
        %v1814 = vadd.f32 %v1770, %v1795
        %v1815 = vadd.f32 %v1771, %v1799
        %v1816 = vadd.f32 %v1772, %v1795
        %v1817 = vadd.f32 %v1773, %v1799
        %v1818 = vadd.f32 %v1774, %v1795
        %v1819 = vadd.f32 %v1775, %v1799
        %v1820 = vadd.f32 %v1776, %v1795
        %v1821 = vadd.f32 %v1777, %v1799
        %v1822 = vadd.f32 %v1778, %v1795
        %v1823 = vadd.f32 %v1779, %v1799
        %v1824 = vadd.f32 %v1780, %v1795
        %v1825 = vadd.f32 %v1781, %v1799
        %v1826 = vadd.f32 %v1782, %v1795
        %v1827 = vadd.f32 %v1783, %v1799
        %v1828 = vadd.f32 %v1784, %v1795
        %v1829 = vadd.f32 %v1785, %v1799
        %v1830 = vadd.f32 %v1786, %v1795
        %v1831 = vadd.f32 %v1787, %v1799
        %v1832 = vadd.f32 %v1788, %v1795
        %v1833 = vadd.f32 %v1789, %v1799
        %v1834 = vmax.f32 %v1802, 0.0
        %v1835 = vmax.f32 %v1803, 0.0
        %v1836 = vmax.f32 %v1804, 0.0
        %v1837 = vmax.f32 %v1805, 0.0
        %v1838 = vmax.f32 %v1806, 0.0
        %v1839 = vmax.f32 %v1807, 0.0
        %v1840 = vmax.f32 %v1808, 0.0
        %v1841 = vmax.f32 %v1809, 0.0
        %v1842 = vmax.f32 %v1810, 0.0
        %v1843 = vmax.f32 %v1811, 0.0
        %v1844 = vmax.f32 %v1812, 0.0
        %v1845 = vmax.f32 %v1813, 0.0
        %v1846 = vmax.f32 %v1814, 0.0
        %v1847 = vmax.f32 %v1815, 0.0
        %v1848 = vmax.f32 %v1816, 0.0
        %v1849 = vmax.f32 %v1817, 0.0
        %v1850 = vmax.f32 %v1818, 0.0
        %v1851 = vmax.f32 %v1819, 0.0
        %v1852 = vmax.f32 %v1820, 0.0
        %v1853 = vmax.f32 %v1821, 0.0
        %v1854 = vmax.f32 %v1822, 0.0
        %v1855 = vmax.f32 %v1823, 0.0
        %v1856 = vmax.f32 %v1824, 0.0
        %v1857 = vmax.f32 %v1825, 0.0
        %v1858 = vmax.f32 %v1826, 0.0
        %v1859 = vmax.f32 %v1827, 0.0
        %v1860 = vmax.f32 %v1828, 0.0
        %v1861 = vmax.f32 %v1829, 0.0
        %v1862 = vmax.f32 %v1830, 0.0
        %v1863 = vmax.f32 %v1831, 0.0
        %v1864 = vmax.f32 %v1832, 0.0
        %v1865 = vmax.f32 %v1833, 0.0
        %v1866 = vadd.f32 %v1834, %v1836
        %v1867 = vadd.f32 %v1866, %v1838
        %v1868 = vadd.f32 %v1867, %v1840
        %v1869 = vadd.f32 %v1868, %v1842
        %v1870 = vadd.f32 %v1869, %v1844
        %v1871 = vadd.f32 %v1870, %v1846
        %v1872 = vadd.f32 %v1871, %v1848
        %v1873 = vadd.f32 %v1872, %v1850
        %v1874 = vadd.f32 %v1873, %v1852
        %v1875 = vadd.f32 %v1874, %v1854
        %v1876 = vadd.f32 %v1875, %v1856
        %v1877 = vadd.f32 %v1876, %v1858
        %v1878 = vadd.f32 %v1877, %v1860
        %v1879 = vadd.f32 %v1878, %v1862
        %v1880 = vadd.f32 %v1879, %v1864
        %v1881 = vadd.f32 %v1835, %v1837
        %v1882 = vadd.f32 %v1881, %v1839
        %v1883 = vadd.f32 %v1882, %v1841
        %v1884 = vadd.f32 %v1883, %v1843
        %v1885 = vadd.f32 %v1884, %v1845
        %v1886 = vadd.f32 %v1885, %v1847
        %v1887 = vadd.f32 %v1886, %v1849
        %v1888 = vadd.f32 %v1887, %v1851
        %v1889 = vadd.f32 %v1888, %v1853
        %v1890 = vadd.f32 %v1889, %v1855
        %v1891 = vadd.f32 %v1890, %v1857
        %v1892 = vadd.f32 %v1891, %v1859
        %v1893 = vadd.f32 %v1892, %v1861
        %v1894 = vadd.f32 %v1893, %v1863
        %v1895 = vadd.f32 %v1894, %v1865
        %v1896 = vld [vmem:[%s6] sm:$0xff]
        %v1897 = vld [vmem:[%s6 + $0x8] sm:$0xff]
        %v1898 = vld [vmem:[%s6 + $0x10] sm:$0xff]
        %v1899 = vld [vmem:[%s6 + $0x18] sm:$0xff]
        %v1900 = vld [vmem:[%s6 + $0x20] sm:$0xff]
        %v1901 = vld [vmem:[%s6 + $0x28] sm:$0xff]
        %v1902 = vld [vmem:[%s6 + $0x30] sm:$0xff]
        %v1903 = vld [vmem:[%s6 + $0x38] sm:$0xff]
        %v1904 = vld [vmem:[%s6 + $0x40] sm:$0xff]
        %v1905 = vld [vmem:[%s6 + $0x48] sm:$0xff]
        %v1906 = vld [vmem:[%s6 + $0x50] sm:$0xff]
        %v1907 = vld [vmem:[%s6 + $0x58] sm:$0xff]
        %v1908 = vld [vmem:[%s6 + $0x60] sm:$0xff]
        %v1909 = vld [vmem:[%s6 + $0x68] sm:$0xff]
        %v1910 = vld [vmem:[%s6 + $0x70] sm:$0xff]
        %v1911 = vld [vmem:[%s6 + $0x78] sm:$0xff]
        %v1912 = vld [vmem:[%s6 + $0x80] sm:$0xff]
        %v1913 = vld [vmem:[%s6 + $0x88] sm:$0xff]
        %v1914 = vld [vmem:[%s6 + $0x90] sm:$0xff]
        %v1915 = vld [vmem:[%s6 + $0x98] sm:$0xff]
        %v1916 = vld [vmem:[%s6 + $0xa0] sm:$0xff]
        %v1917 = vld [vmem:[%s6 + $0xa8] sm:$0xff]
        %v1918 = vld [vmem:[%s6 + $0xb0] sm:$0xff]
        %v1919 = vld [vmem:[%s6 + $0xb8] sm:$0xff]
        %v1920 = vld [vmem:[%s6 + $0xc0] sm:$0xff]
        %v1921 = vld [vmem:[%s6 + $0xc8] sm:$0xff]
        %v1922 = vld [vmem:[%s6 + $0xd0] sm:$0xff]
        %v1923 = vld [vmem:[%s6 + $0xd8] sm:$0xff]
        %v1924 = vld [vmem:[%s6 + $0xe0] sm:$0xff]
        %v1925 = vld [vmem:[%s6 + $0xe8] sm:$0xff]
        %v1926 = vld [vmem:[%s6 + $0xf0] sm:$0xff]
        %v1927 = vld [vmem:[%s6 + $0xf8] sm:$0xff]
        %1928 = vmatprep.subr.mxu0 0.0
        %1929 = vmatpush1.msra.mxu0 %v1896
        %1930 = vmatprep.subr.mxu0 0.0
        %1931 = vmatpush1.msra.mxu0 %v1897
        %1932 = vmatprep.subr.mxu0 0.0
        %1933 = vmatpush1.msra.mxu0 %v1898
        %1934 = vmatprep.subr.mxu0 0.0
        %1935 = vmatpush1.msra.mxu0 %v1899
        %1936 = vmatprep.subr.mxu0 0.0
        %1937 = vmatpush1.msra.mxu0 %v1900
        %1938 = vmatprep.subr.mxu0 0.0
        %1939 = vmatpush1.msra.mxu0 %v1901
        %1940 = vmatprep.subr.mxu0 0.0
        %1941 = vmatpush1.msra.mxu0 %v1902
        %1942 = vmatprep.subr.mxu0 0.0
        %1943 = vmatpush1.msra.mxu0 %v1903
        %1944 = vmatprep.subr.mxu0 0.0
        %1945 = vmatpush1.msra.mxu0 %v1904
        %1946 = vmatprep.subr.mxu0 0.0
        %1947 = vmatpush1.msra.mxu0 %v1905
        %1948 = vmatprep.subr.mxu0 0.0
        %1949 = vmatpush1.msra.mxu0 %v1906
        %1950 = vmatprep.subr.mxu0 0.0
        %1951 = vmatpush1.msra.mxu0 %v1907
        %1952 = vmatprep.subr.mxu0 0.0
        %1953 = vmatpush1.msra.mxu0 %v1908
        %1954 = vmatprep.subr.mxu0 0.0
        %1955 = vmatpush1.msra.mxu0 %v1909
        %1956 = vmatprep.subr.mxu0 0.0
        %1957 = vmatpush1.msra.mxu0 %v1910
        %1958 = vmatprep.subr.mxu0 0.0
        %1959 = vmatpush1.msra.mxu0 %v1911
        %1960 = vmatprep.subr.mxu0 0.0
        %1961 = vmatpush1.msra.mxu0 %v1912
        %1962 = vmatprep.subr.mxu0 0.0
        %1963 = vmatpush1.msra.mxu0 %v1913
        %1964 = vmatprep.subr.mxu0 0.0
        %1965 = vmatpush1.msra.mxu0 %v1914
        %1966 = vmatprep.subr.mxu0 0.0
        %1967 = vmatpush1.msra.mxu0 %v1915
        %1968 = vmatprep.subr.mxu0 0.0
        %1969 = vmatpush1.msra.mxu0 %v1916
        %1970 = vmatprep.subr.mxu0 0.0
        %1971 = vmatpush1.msra.mxu0 %v1917
        %1972 = vmatprep.subr.mxu0 0.0
        %1973 = vmatpush1.msra.mxu0 %v1918
        %1974 = vmatprep.subr.mxu0 0.0
        %1975 = vmatpush1.msra.mxu0 %v1919
        %1976 = vmatprep.subr.mxu0 0.0
        %1977 = vmatpush1.msra.mxu0 %v1920
        %1978 = vmatprep.subr.mxu0 0.0
        %1979 = vmatpush1.msra.mxu0 %v1921
        %1980 = vmatprep.subr.mxu0 0.0
        %1981 = vmatpush1.msra.mxu0 %v1922
        %1982 = vmatprep.subr.mxu0 0.0
        %1983 = vmatpush1.msra.mxu0 %v1923
        %1984 = vmatprep.subr.mxu0 0.0
        %1985 = vmatpush1.msra.mxu0 %v1924
        %1986 = vmatprep.subr.mxu0 0.0
        %1987 = vmatpush1.msra.mxu0 %v1925
        %1988 = vmatprep.subr.mxu0 0.0
        %1989 = vmatpush1.msra.mxu0 %v1926
        %1990 = vmatprep.subr.mxu0 0.0
        %1991 = vmatpush1.msra.mxu0 %v1927
        %1992 = vmatprep.mubr.f32.mxu0 %v1895
        %1993 = vmatmul.mubr.f32.gmra.mrb[0].mxu0 %v1880
        %v1994 = vpop.f32.mrb[0].mxu0
        %v1995 = vadd.f32 0.0, %v1994
        %v1996 = vpop.f32.mrb[0].mxu0
        %1997 = vdwg.mxu0
        %1998 = vst [vmem:[%s272] sm:$0xff] %v1995
        %s1999 = sand.u32 %s181, 1
        %s2000 = scalar_lea.sflag [#allocation3], %s1999
        %s2001 = sand.u32 %s181, 1
        %s2002 = smul.addr %s2001, 8
        %s2003 = scalar_lea.vmem [#allocation2], %s2002
        // Predicated region
        $region49: #{cnn_extract.1} parent=47 // pred_check
          %p2004 = pneg %p191
        $region50: #{cnn_extract.1} parent=47 // pred_check_branch
          %2006 = sbr.rel (%p2004) target = $region52
        $region51: #{cnn_extract.1} parent=47 // pred_region
          %s2008 = ssub.s32 128, 128
          %2009 = vsyncadd %s2000, %s2008
          %s2010 = smul.addr %s21, 128
          %s2011 = scalar_lea.hbm %s7, %s2010
          %s2013 = sshll.u32 %s2003, 4
          %s2014 = int_to_ptr.vmem [resolvable:$true] %s2013
          %2016 = dma.vmem_to_hbm [thread:$0]  %s2014, 128, %s2011, %s2000
        $region52: #{cnn_extract.1} parent=47 // pred_fallthru
          _
      $region48: #{cnn_extract.1} parent=5 // pred_fallthru
        _
      %p2017 = scmp.le.s32.totalorder 2, %s16
      // Predicated region
      $region53: #{cnn_extract.1} parent=5 // pred_check
        %p2018 = pneg %p2017
      $region54: #{cnn_extract.1} parent=5 // pred_check_branch
        %2020 = sbr.rel (%p2018) target = $region56
      $region55: #{cnn_extract.1} parent=5 // pred_region
        %s2021 = ssub.s32 %s16, 2
        // Predicated region
        $region57: #{cnn_extract.1} parent=55 // pred_check
          %p2022 = pneg %p197
        $region58: #{cnn_extract.1} parent=55 // pred_check_branch
          %2024 = sbr.rel (%p2022) target = $region60
        $region59: #{cnn_extract.1} parent=55 // pred_region
          %s2025 = sand.u32 %s182, 1
          %s2026 = scalar_lea.sflag [#allocation3], %s2025
          %s2027 = sand.u32 %s182, 1
          %s2028 = smul.addr %s2027, 8
          %s2029 = scalar_lea.vmem [#allocation2], %s2028
          %2030 = dma.done %s2026, 128
        $region60: #{cnn_extract.1} parent=55 // pred_fallthru
          _
      $region56: #{cnn_extract.1} parent=5 // pred_fallthru
        _
    $region6: #{cnn_extract.1} parent=1 // loop_footer
      %s20 = sadd.s32 1, %s16
    $region7: #{cnn_extract.1} parent=1 // loop_footer_branch
      %15 = sbr.rel target = $region3
    $region8: #{cnn_extract.1} parent=1 // loop_exit
      _
    %2031 = vsyncpa [#allocation3], 1
    %s2032 = scalar_lea.sflag [#allocation3], 1
    %2033 = vsyncpa %s2032, 1

</llo_original>
